<compile_context>
chip_gen: v6e
topology: v6e:2x2x1
jax: 0.10.0
libtpu: 0.0.40
codegen_flags: <defaults>
</compile_context>

<pallas_src>
import functools

import jax
import jax.numpy as jnp
import numpy as np
from jax.experimental import pallas as pl
from jax.experimental.pallas import tpu as pltpu


def ep_loss_kernel(x_rows_ref, xt_ref, row_sq_ref, col_sq_ref,
                   lab_row_ref, lab_col_ref, out_ref, *,
                   inv_temp, mxu_precision):
    tm = x_rows_ref.shape[0]
    B = xt_ref.shape[1]

    # (tm, D) x (D, B) Gram block on the MXU, f32 accumulation.  RHS is
    # pre-transposed in the wrapper, so no per-step XLU transpose and the
    # (tm, B) result is lane-dense on B.
    gram = jax.lax.dot_general(
        x_rows_ref[...], xt_ref[...],
        (((1,), (0,)), ((), ())),
        precision=mxu_precision,
        preferred_element_type=jnp.float32)                        # (tm, B)

    # Squared distances; both norm vectors precomputed in the wrapper.
    d2 = row_sq_ref[...] + col_sq_ref[...] - 2.0 * gram            # (tm, B) f32

    # Masks built in-kernel from labels (no dense (B, B) mask traffic).
    lab_r = lab_row_ref[...]                                       # (tm, 1) i32
    lab_c = lab_col_ref[...]                                       # (1, B)  i32
    eq = lab_r == lab_c                                            # (tm, B)
    row_ids = (jax.lax.broadcasted_iota(jnp.int32, (tm, 1), 0)
               + pl.program_id(0) * tm)                            # global anchor ids
    col_ids = jax.lax.broadcasted_iota(jnp.int32, (1, B), 1)
    pos = jnp.logical_and(eq, row_ids != col_ids)                  # same class, not self
    neg = jnp.logical_not(eq)

    # Minimise over d2 (sqrt is monotonic); sqrt only the two (tm, 1) results.
    BIG = jnp.float32(1e30)
    d2_pos = jnp.min(jnp.where(pos, d2, BIG), axis=-1, keepdims=True)
    d2_neg = jnp.min(jnp.where(neg, d2, BIG), axis=-1, keepdims=True)
    d_pos = jnp.sqrt(jnp.maximum(d2_pos, 0.0))
    d_neg = jnp.sqrt(jnp.maximum(d2_neg, 0.0))

    # One cross-lane reduction gives both counts: n_pos = #same-class - 1
    # (self always matches), n_neg = B - #same-class.
    n_eq = jnp.sum(eq.astype(jnp.int32), axis=-1, keepdims=True)
    n_pos = n_eq - 1
    n_neg = B - n_eq
    # Valid: > 1 other positive (original `np.sum(pos) > 1`) and >= 1 negative.
    valid = jnp.logical_and(n_pos > 1, n_neg > 0).astype(jnp.float32)

    # -log_softmax([s_ap, s_an]/temp)[0] == softplus((d_pos - d_neg)/(2*temp))
    delta = (d_pos - d_neg) * (0.5 * inv_temp)
    per_anchor = jnp.maximum(delta, 0.0) + jnp.log(1.0 + jnp.exp(-jnp.abs(delta)))

    tile_sum = jnp.sum(per_anchor * valid)
    tile_cnt = jnp.sum(valid)
    # Merged (1, 1, 2) output block: [partial_sum, partial_count].
    lane = jax.lax.broadcasted_iota(jnp.int32, (1, 1, 2), 2)
    out_ref[...] = jnp.where(lane == 0, tile_sum, tile_cnt)


def _tpu_generation():
    try:
        kind = jax.devices()[0].device_kind.lower()
    except Exception:
        return None
    for g in (7, 6, 5, 4):
        if f"v{g}" in kind:
            return g
    return None


def _sublane_pack(dtype):
    # f32 packs (8,128); bf16 (16,128); int8/fp8 (32,128).
    return {4: 8, 2: 16, 1: 32}.get(jnp.dtype(dtype).itemsize, 8)


def _pick_tm(B, dtype):
    pack = _sublane_pack(dtype)
    gen = _tpu_generation()
    if gen == 6:
        cap = 256 if B >= 512 else 128      # fill v6e's 256-wide MXU
    elif gen == 7:
        cap = 64 if B >= 4096 else 128      # v7x: half the VMEM of v5e/v6e
    else:
        cap = 128                           # v5e / unknown: VPU-bound regime
    # v7x has 2 TensorCores: keep at least 2 steps on the parallel axis.
    if gen == 7:
        half = B // 2
        if half >= pack and half % pack == 0 and B % half == 0:
            cap = min(cap, half)
    if B <= cap:
        return B                            # single full-batch tile is always legal
    for tm in (256, 128, 64, 32, 16, 8):
        if tm <= cap and tm % pack == 0 and B % tm == 0:
            return tm
    return B


def _vmem_limit_bytes(B, D, tm, itemsize, single_buffer, gen):
    n_resident_buf = 1 if single_buffer else 2
    resident = n_resident_buf * (D * B * itemsize + 2 * B * 4)   # batch^T + col_sq + labels
    tiles = 2 * (tm * D * itemsize + 2 * tm * 4) + 64            # double-buffered row blocks
    work = 8 * tm * B * 4                                        # gram/d2/mask temporaries
    est = resident + tiles + work + (1 << 20)
    if est <= 24 * (1 << 20):
        return None                                              # default scoped limit suffices
    phys_cap = 48 * (1 << 20) if gen == 7 else 100 * (1 << 20)
    return int(min(est * 1.25, phys_cap))


def _build_call(B, D, tm, nt, dtype, inv_temp, mxu_precision, single_buffer, gen):
    def const_spec(shape):
        idx = lambda i: (0,) * len(shape)
        if single_buffer:
            # Grid-constant block: one buffer is enough (it is DMA'd once),
            # halving its VMEM footprint.
            return pl.BlockSpec(shape, idx,
                                pipeline_mode=pl.Buffered(buffer_count=1))
        return pl.BlockSpec(shape, idx)

    kernel = functools.partial(ep_loss_kernel, inv_temp=inv_temp,
                               mxu_precision=mxu_precision)
    itemsize = jnp.dtype(dtype).itemsize
    return pl.pallas_call(
        kernel,
        out_shape=jax.ShapeDtypeStruct((nt, 1, 2), jnp.float32),
        grid=(nt,),
        in_specs=[
            pl.BlockSpec((tm, D), lambda i: (i, 0)),   # anchor rows (tiled)
            const_spec((D, B)),                        # batch^T (resident)
            pl.BlockSpec((tm, 1), lambda i: (i, 0)),   # row squared norms
            const_spec((1, B)),                        # col squared norms
            pl.BlockSpec((tm, 1), lambda i: (i, 0)),   # anchor labels (tiled)
            const_spec((1, B)),                        # all labels
        ],
        out_specs=pl.BlockSpec((1, 1, 2), lambda i: (i, 0, 0)),
        compiler_params=pltpu.CompilerParams(
            dimension_semantics=("parallel",),
            vmem_limit_bytes=_vmem_limit_bytes(B, D, tm, itemsize,
                                               single_buffer, gen)),
    )


def ep_loss(batch, labels, temp=0.2, tm=None):
    """batch: (B, D) float, labels: (B,) int. Returns loss of shape (1,)."""
    batch = jnp.asarray(batch)
    labels = jnp.asarray(labels, dtype=jnp.int32).reshape(-1)
    B, D = batch.shape
    if tm is None:
        tm = _pick_tm(B, batch.dtype)
    assert B % tm == 0, "anchor tile size must divide the batch size"
    nt = B // tm
    gen = _tpu_generation()

    # One-time XLA-side prep: transpose (lane axis = B) and shared norm vector.
    batch_t = jnp.transpose(batch)                                   # (D, B)
    sq = jnp.sum(batch.astype(jnp.float32) ** 2, axis=-1)            # (B,)
    row_sq = sq.reshape(B, 1)
    col_sq = sq.reshape(1, B)
    lab_row = labels.reshape(B, 1)
    lab_col = labels.reshape(1, B)

    # f32 inputs: keep the Gram accurate (d2 cancels near the easy positive);
    # bf16/int8 inputs keep the native fast MXU path.
    mxu_precision = (jax.lax.Precision.HIGHEST
                     if batch.dtype == jnp.float32 else None)
    inv_temp = 1.0 / float(temp)
    args = (batch, batch_t, row_sq, col_sq, lab_row, lab_col)

    try:
        partials = _build_call(B, D, tm, nt, batch.dtype, inv_temp,
                               mxu_precision, True, gen)(*args)
    except Exception:
        # Fallback for jax builds whose TPU lowering rejects single-buffered
        # (pl.Buffered(1)) BlockSpecs; semantics are identical.
        partials = _build_call(B, D, tm, nt, batch.dtype, inv_temp,
                               mxu_precision, False, gen)(*args)

    total = jnp.sum(partials[:, 0, 0])
    count = jnp.sum(partials[:, 0, 1])
    # Guard against count == 0 (no valid anchors): loss 0 instead of NaN.
    return (total / jnp.maximum(count, 1.0)).reshape((1,))


def reference_loss(batch, labels, temp=0.2):
    """Pure numpy mirror of the PyTorch forward (same deterministic miner)."""
    x = np.asarray(batch, dtype=np.float64)
    labels = np.asarray(labels)
    B = x.shape[0]
    d = np.sqrt(np.maximum(((x[:, None, :] - x[None, :, :]) ** 2).sum(-1), 0.0))
    loss, count = 0.0, 0
    for i in range(B):
        pos = labels == labels[i]
        pos[i] = False
        neg = labels != labels[i]
        if pos.sum() > 1 and neg.sum() > 0:
            p = np.where(pos)[0][np.argmin(d[i][pos])]
            n = np.where(neg)[0][np.argmin(d[i][neg])]
            s_ap = 1.0 - d[i, p] / 2.0
            s_an = 1.0 - d[i, n] / 2.0
            z = np.array([s_ap, s_an]) / temp
            m = z.max()
            lse = m + np.log(np.exp(z - m).sum())
            loss += -(z[0] - lse)
            count += 1
    return np.array([loss / max(count, 1)], dtype=np.float32)


if __name__ == "__main__":
    temp = 0.2
    key = jax.random.PRNGKey(0)

    # Case 1: multi-tile grid (B=16, tm=8 -> 2 anchor tiles); includes a class
    # of size 2 so the "needs > 1 other positive" branch is exercised.
    B1, D1 = 16, 32
    batch1 = jax.random.normal(key, (B1, D1), dtype=jnp.float32)
    labels1 = jnp.array([0, 0, 0, 0, 0, 1, 1, 1, 1, 1, 2, 2, 2, 2, 3, 3],
                        dtype=jnp.int32)
    loss1 = ep_loss(batch1, labels1, temp, tm=8)
    jax.block_until_ready(loss1)
    ref1 = reference_loss(np.asarray(batch1), np.asarray(labels1), temp)
    if not np.allclose(np.asarray(loss1), ref1, rtol=1e-4, atol=1e-4):
        raise AssertionError(f"mismatch (tiled): pallas={np.asarray(loss1)} ref={ref1}")

    # Case 2: single-tile path (B=8, auto tm).
    B2, D2 = 8, 32
    batch2 = jax.random.normal(jax.random.PRNGKey(1), (B2, D2), dtype=jnp.float32)
    labels2 = jnp.array([0, 0, 0, 1, 1, 1, 2, 2], dtype=jnp.int32)
    loss2 = ep_loss(batch2, labels2, temp)
    jax.block_until_ready(loss2)
    ref2 = reference_loss(np.asarray(batch2), np.asarray(labels2), temp)
    if not np.allclose(np.asarray(loss2), ref2, rtol=1e-4, atol=1e-4):
        raise AssertionError(f"mismatch (single): pallas={np.asarray(loss2)} ref={ref2}")

    print("KERNEL_OK")
</pallas_src>

<mosaic_0001>
module attributes {stable_mosaic.version = 11 : i64} {
  func.func @ep_loss_kernel(%arg0: i32, %arg1: memref<8x32xf32, #tpu.memory_space<vmem>>, %arg2: memref<32x16xf32, #tpu.memory_space<vmem>>, %arg3: memref<8x1xf32, #tpu.memory_space<vmem>>, %arg4: memref<1x16xf32, #tpu.memory_space<vmem>>, %arg5: memref<8x1xi32, #tpu.memory_space<vmem>>, %arg6: memref<1x16xi32, #tpu.memory_space<vmem>>, %arg7: memref<1x1x2xf32, #tpu.memory_space<vmem>>) attributes {dimension_semantics = [#tpu.dimension_semantics<parallel>], iteration_bounds = array<i64: 2>, scalar_prefetch = 0 : i64, scratch_operands = 0 : i64, tpu.core_type = #tpu.core_type<tc>, window_params = [{transform_indices = @transform_0, window_bounds = array<i64: 8, 32>}, {pipeline_mode = #tpu.pipeline_mode<synchronous>, transform_indices = @transform_1, window_bounds = array<i64: 32, 16>}, {transform_indices = @transform_2, window_bounds = array<i64: 8, 1>}, {pipeline_mode = #tpu.pipeline_mode<synchronous>, transform_indices = @transform_3, window_bounds = array<i64: 1, 16>}, {transform_indices = @transform_4, window_bounds = array<i64: 8, 1>}, {pipeline_mode = #tpu.pipeline_mode<synchronous>, transform_indices = @transform_5, window_bounds = array<i64: 1, 16>}, {transform_indices = @transform_6, window_bounds = array<i64: 1, 1, 2>}]} {
    %c0 = arith.constant 0 : index
    %c0_0 = arith.constant 0 : index
    %0 = vector.load %arg1[%c0, %c0_0] : memref<8x32xf32, #tpu.memory_space<vmem>>, vector<8x32xf32>
    %c0_1 = arith.constant 0 : index
    %c0_2 = arith.constant 0 : index
    %1 = vector.load %arg2[%c0_1, %c0_2] : memref<32x16xf32, #tpu.memory_space<vmem>>, vector<32x16xf32>
    %cst = arith.constant dense<0.000000e+00> : vector<8x16xf32>
    %2 = tpu.matmul %0, %1, %cst {dimension_numbers = #tpu.dot_dimension_numbers<[1], [0], [0], [1], [0, 0, 1, 1], [], []>, precision = #tpu.contract_precision<fp32>} : vector<8x32xf32>, vector<32x16xf32>, vector<8x16xf32> -> vector<8x16xf32>
    %c0_3 = arith.constant 0 : index
    %c0_4 = arith.constant 0 : index
    %3 = vector.load %arg3[%c0_3, %c0_4] : memref<8x1xf32, #tpu.memory_space<vmem>>, vector<8x1xf32>
    %c0_5 = arith.constant 0 : index
    %c0_6 = arith.constant 0 : index
    %4 = vector.load %arg4[%c0_5, %c0_6] : memref<1x16xf32, #tpu.memory_space<vmem>>, vector<1x16xf32>
    %5 = vector.broadcast %3 : vector<8x1xf32> to vector<8x16xf32>
    %6 = vector.broadcast %4 : vector<1x16xf32> to vector<8x16xf32>
    %7 = arith.addf %5, %6 : vector<8x16xf32>
    %cst_7 = arith.constant 2.000000e+00 : f32
    %8 = vector.broadcast %cst_7 : f32 to vector<8x16xf32>
    %9 = arith.mulf %8, %2 : vector<8x16xf32>
    %10 = arith.subf %7, %9 : vector<8x16xf32>
    %c0_8 = arith.constant 0 : index
    %c0_9 = arith.constant 0 : index
    %11 = vector.load %arg5[%c0_8, %c0_9] : memref<8x1xi32, #tpu.memory_space<vmem>>, vector<8x1xi32>
    %c0_10 = arith.constant 0 : index
    %c0_11 = arith.constant 0 : index
    %12 = vector.load %arg6[%c0_10, %c0_11] : memref<1x16xi32, #tpu.memory_space<vmem>>, vector<1x16xi32>
    %13 = vector.broadcast %11 : vector<8x1xi32> to vector<8x16xi32>
    %14 = vector.broadcast %12 : vector<1x16xi32> to vector<8x16xi32>
    %15 = arith.cmpi eq, %13, %14 : vector<8x16xi32>
    %16 = tpu.iota {dimensions = array<i32: 0>} : vector<8x1xi32>
    %c8_i32 = arith.constant 8 : i32
    %17 = arith.muli %arg0, %c8_i32 : i32
    %18 = vector.broadcast %17 : i32 to vector<8x1xi32>
    %19 = arith.addi %16, %18 : vector<8x1xi32>
    %20 = tpu.iota {dimensions = array<i32: 1>} : vector<1x16xi32>
    %21 = vector.broadcast %19 : vector<8x1xi32> to vector<8x16xi32>
    %22 = vector.broadcast %20 : vector<1x16xi32> to vector<8x16xi32>
    %23 = arith.cmpi ne, %21, %22 : vector<8x16xi32>
    %24 = arith.andi %15, %23 : vector<8x16xi1>
    %cst_12 = arith.constant dense<true> : vector<8x16xi1>
    %25 = arith.xori %15, %cst_12 : vector<8x16xi1>
    %cst_13 = arith.constant 1.000000e+30 : f32
    %26 = vector.broadcast %cst_13 : f32 to vector<8x16xf32>
    %27 = arith.select %24, %10, %26 : vector<8x16xi1>, vector<8x16xf32>
    %cst_14 = arith.constant dense<0x7F800000> : vector<8xf32>
    %28 = vector.multi_reduction <minimumf>, %27, %cst_14 [1] : vector<8x16xf32> to vector<8xf32>
    %29 = vector.shape_cast %28 : vector<8xf32> to vector<8x1xf32>
    %cst_15 = arith.constant 1.000000e+30 : f32
    %30 = vector.broadcast %cst_15 : f32 to vector<8x16xf32>
    %31 = arith.select %25, %10, %30 : vector<8x16xi1>, vector<8x16xf32>
    %cst_16 = arith.constant dense<0x7F800000> : vector<8xf32>
    %32 = vector.multi_reduction <minimumf>, %31, %cst_16 [1] : vector<8x16xf32> to vector<8xf32>
    %33 = vector.shape_cast %32 : vector<8xf32> to vector<8x1xf32>
    %cst_17 = arith.constant 0.000000e+00 : f32
    %34 = vector.broadcast %cst_17 : f32 to vector<8x1xf32>
    %35 = arith.maximumf %29, %34 : vector<8x1xf32>
    %36 = math.sqrt %35 : vector<8x1xf32>
    %cst_18 = arith.constant 0.000000e+00 : f32
    %37 = vector.broadcast %cst_18 : f32 to vector<8x1xf32>
    %38 = arith.maximumf %33, %37 : vector<8x1xf32>
    %39 = math.sqrt %38 : vector<8x1xf32>
    %40 = arith.extui %15 : vector<8x16xi1> to vector<8x16xi32>
    %cst_19 = arith.constant dense<0> : vector<8xi32>
    %41 = vector.multi_reduction <add>, %40, %cst_19 [1] : vector<8x16xi32> to vector<8xi32>
    %42 = vector.shape_cast %41 : vector<8xi32> to vector<8x1xi32>
    %c1_i32 = arith.constant 1 : i32
    %43 = vector.broadcast %c1_i32 : i32 to vector<8x1xi32>
    %44 = arith.subi %42, %43 : vector<8x1xi32>
    %c16_i32 = arith.constant 16 : i32
    %45 = vector.broadcast %c16_i32 : i32 to vector<8x1xi32>
    %46 = arith.subi %45, %42 : vector<8x1xi32>
    %c1_i32_20 = arith.constant 1 : i32
    %47 = vector.broadcast %c1_i32_20 : i32 to vector<8x1xi32>
    %48 = arith.cmpi sgt, %44, %47 : vector<8x1xi32>
    %c0_i32 = arith.constant 0 : i32
    %49 = vector.broadcast %c0_i32 : i32 to vector<8x1xi32>
    %50 = arith.cmpi sgt, %46, %49 : vector<8x1xi32>
    %51 = arith.andi %48, %50 : vector<8x1xi1>
    %52 = arith.extui %51 : vector<8x1xi1> to vector<8x1xi32>
    %53 = arith.sitofp %52 : vector<8x1xi32> to vector<8x1xf32>
    %54 = arith.subf %36, %39 : vector<8x1xf32>
    %cst_21 = arith.constant 2.500000e+00 : f32
    %55 = vector.broadcast %cst_21 : f32 to vector<8x1xf32>
    %56 = arith.mulf %54, %55 : vector<8x1xf32>
    %cst_22 = arith.constant 0.000000e+00 : f32
    %57 = vector.broadcast %cst_22 : f32 to vector<8x1xf32>
    %58 = arith.maximumf %56, %57 : vector<8x1xf32>
    %59 = math.absf %56 : vector<8x1xf32>
    %cst_23 = arith.constant 0.000000e+00 : f32
    %60 = vector.broadcast %cst_23 : f32 to vector<8x1xf32>
    %61 = arith.subf %60, %59 : vector<8x1xf32>
    %62 = math.exp %61 : vector<8x1xf32>
    %cst_24 = arith.constant 1.000000e+00 : f32
    %63 = vector.broadcast %cst_24 : f32 to vector<8x1xf32>
    %64 = arith.addf %63, %62 : vector<8x1xf32>
    %65 = math.log %64 : vector<8x1xf32>
    %66 = arith.addf %58, %65 : vector<8x1xf32>
    %67 = arith.mulf %66, %53 : vector<8x1xf32>
    %68 = vector.shape_cast %67 : vector<8x1xf32> to vector<1x8x1xf32>
    %cst_25 = arith.constant dense<0.000000e+00> : vector<1xf32>
    %69 = vector.multi_reduction <add>, %68, %cst_25 [1, 2] : vector<1x8x1xf32> to vector<1xf32>
    %70 = vector.shape_cast %69 : vector<1xf32> to vector<1x1x1xf32>
    %71 = vector.extract %70[0, 0, 0] : f32 from vector<1x1x1xf32>
    %72 = vector.shape_cast %53 : vector<8x1xf32> to vector<1x8x1xf32>
    %cst_26 = arith.constant dense<0.000000e+00> : vector<1xf32>
    %73 = vector.multi_reduction <add>, %72, %cst_26 [1, 2] : vector<1x8x1xf32> to vector<1xf32>
    %74 = vector.shape_cast %73 : vector<1xf32> to vector<1x1x1xf32>
    %75 = vector.extract %74[0, 0, 0] : f32 from vector<1x1x1xf32>
    %76 = tpu.iota {dimensions = array<i32: 2>} : vector<1x1x2xi32>
    %c0_i32_27 = arith.constant 0 : i32
    %77 = vector.broadcast %c0_i32_27 : i32 to vector<1x1x2xi32>
    %78 = arith.cmpi eq, %76, %77 : vector<1x1x2xi32>
    %79 = vector.broadcast %71 : f32 to vector<1x1x2xf32>
    %80 = vector.broadcast %75 : f32 to vector<1x1x2xf32>
    %81 = arith.select %78, %79, %80 : vector<1x1x2xi1>, vector<1x1x2xf32>
    %c0_28 = arith.constant 0 : index
    %c0_29 = arith.constant 0 : index
    %c0_30 = arith.constant 0 : index
    %82 = vector.load %arg7[%c0_28, %c0_29, %c0_30] : memref<1x1x2xf32, #tpu.memory_space<vmem>>, vector<1x1x2xf32>
    tpu.vector_store %arg7[%c0_28, %c0_29, %c0_30], %81 {strides = array<i32>} : memref<1x1x2xf32, #tpu.memory_space<vmem>>, vector<1x1x2xf32>,
    return
  }
  func.func @transform_0(%arg0: i32) -> (i32, i32) {
    %c0_i32 = arith.constant 0 : i32
    %c0_i32_0 = arith.constant 0 : i32
    return %arg0, %c0_i32 : i32, i32
  }
  func.func @transform_1(%arg0: i32) -> (i32, i32) {
    %c0_i32 = arith.constant 0 : i32
    %c0_i32_0 = arith.constant 0 : i32
    %c0_i32_1 = arith.constant 0 : i32
    return %c0_i32, %c0_i32_0 : i32, i32
  }
  func.func @transform_2(%arg0: i32) -> (i32, i32) {
    %c0_i32 = arith.constant 0 : i32
    %c0_i32_0 = arith.constant 0 : i32
    return %arg0, %c0_i32 : i32, i32
  }
  func.func @transform_3(%arg0: i32) -> (i32, i32) {
    %c0_i32 = arith.constant 0 : i32
    %c0_i32_0 = arith.constant 0 : i32
    %c0_i32_1 = arith.constant 0 : i32
    return %c0_i32, %c0_i32_0 : i32, i32
  }
  func.func @transform_4(%arg0: i32) -> (i32, i32) {
    %c0_i32 = arith.constant 0 : i32
    %c0_i32_0 = arith.constant 0 : i32
    return %arg0, %c0_i32 : i32, i32
  }
  func.func @transform_5(%arg0: i32) -> (i32, i32) {
    %c0_i32 = arith.constant 0 : i32
    %c0_i32_0 = arith.constant 0 : i32
    %c0_i32_1 = arith.constant 0 : i32
    return %c0_i32, %c0_i32_0 : i32, i32
  }
  func.func @transform_6(%arg0: i32) -> (i32, i32, i32) {
    %c0_i32 = arith.constant 0 : i32
    %c0_i32_0 = arith.constant 0 : i32
    %c0_i32_1 = arith.constant 0 : i32
    return %arg0, %c0_i32, %c0_i32_0 : i32, i32, i32
  }
}

module attributes {stable_mosaic.version = 11 : i64} {
  func.func @ep_loss_kernel(%arg0: i32, %arg1: memref<8x32xf32, #tpu.memory_space<vmem>>, %arg2: memref<32x16xf32, #tpu.memory_space<vmem>>, %arg3: memref<8x1xf32, #tpu.memory_space<vmem>>, %arg4: memref<1x16xf32, #tpu.memory_space<vmem>>, %arg5: memref<8x1xi32, #tpu.memory_space<vmem>>, %arg6: memref<1x16xi32, #tpu.memory_space<vmem>>, %arg7: memref<1x1x2xf32, #tpu.memory_space<vmem>>) attributes {dimension_semantics = [#tpu.dimension_semantics<parallel>], iteration_bounds = array<i64: 2>, scalar_prefetch = 0 : i64, scratch_operands = 0 : i64, tpu.core_type = #tpu.core_type<tc>, window_params = [{transform_indices = @transform_0, window_bounds = array<i64: 8, 32>}, {pipeline_mode = #tpu.pipeline_mode<synchronous>, transform_indices = @transform_1, window_bounds = array<i64: 32, 16>}, {transform_indices = @transform_2, window_bounds = array<i64: 8, 1>}, {pipeline_mode = #tpu.pipeline_mode<synchronous>, transform_indices = @transform_3, window_bounds = array<i64: 1, 16>}, {transform_indices = @transform_4, window_bounds = array<i64: 8, 1>}, {pipeline_mode = #tpu.pipeline_mode<synchronous>, transform_indices = @transform_5, window_bounds = array<i64: 1, 16>}, {transform_indices = @transform_6, window_bounds = array<i64: 1, 1, 2>}]} {
    %c0 = arith.constant 0 : index
    %c0_0 = arith.constant 0 : index
    %0 = vector.load %arg1[%c0, %c0_0] : memref<8x32xf32, #tpu.memory_space<vmem>>, vector<8x32xf32>
    %c0_1 = arith.constant 0 : index
    %c0_2 = arith.constant 0 : index
    %1 = vector.load %arg2[%c0_1, %c0_2] : memref<32x16xf32, #tpu.memory_space<vmem>>, vector<32x16xf32>
    %cst = arith.constant dense<0.000000e+00> : vector<8x16xf32>
    %2 = tpu.matmul %0, %1, %cst {dimension_numbers = #tpu.dot_dimension_numbers<[1], [0], [0], [1], [0, 0, 1, 1], [], []>, precision = #tpu.contract_precision<fp32>} : vector<8x32xf32>, vector<32x16xf32>, vector<8x16xf32> -> vector<8x16xf32>
    %c0_3 = arith.constant 0 : index
    %c0_4 = arith.constant 0 : index
    %3 = vector.load %arg3[%c0_3, %c0_4] : memref<8x1xf32, #tpu.memory_space<vmem>>, vector<8x1xf32>
    %c0_5 = arith.constant 0 : index
    %c0_6 = arith.constant 0 : index
    %4 = vector.load %arg4[%c0_5, %c0_6] : memref<1x16xf32, #tpu.memory_space<vmem>>, vector<1x16xf32>
    %5 = vector.broadcast %3 : vector<8x1xf32> to vector<8x16xf32>
    %6 = vector.broadcast %4 : vector<1x16xf32> to vector<8x16xf32>
    %7 = arith.addf %5, %6 : vector<8x16xf32>
    %cst_7 = arith.constant 2.000000e+00 : f32
    %8 = vector.broadcast %cst_7 : f32 to vector<8x16xf32>
    %9 = arith.mulf %8, %2 : vector<8x16xf32>
    %10 = arith.subf %7, %9 : vector<8x16xf32>
    %c0_8 = arith.constant 0 : index
    %c0_9 = arith.constant 0 : index
    %11 = vector.load %arg5[%c0_8, %c0_9] : memref<8x1xi32, #tpu.memory_space<vmem>>, vector<8x1xi32>
    %c0_10 = arith.constant 0 : index
    %c0_11 = arith.constant 0 : index
    %12 = vector.load %arg6[%c0_10, %c0_11] : memref<1x16xi32, #tpu.memory_space<vmem>>, vector<1x16xi32>
    %13 = vector.broadcast %11 : vector<8x1xi32> to vector<8x16xi32>
    %14 = vector.broadcast %12 : vector<1x16xi32> to vector<8x16xi32>
    %15 = arith.cmpi eq, %13, %14 : vector<8x16xi32>
    %16 = tpu.iota {dimensions = array<i32: 0>} : vector<8x1xi32>
    %c8_i32 = arith.constant 8 : i32
    %17 = arith.muli %arg0, %c8_i32 : i32
    %18 = vector.broadcast %17 : i32 to vector<8x1xi32>
    %19 = arith.addi %16, %18 : vector<8x1xi32>
    %20 = tpu.iota {dimensions = array<i32: 1>} : vector<1x16xi32>
    %21 = vector.broadcast %19 : vector<8x1xi32> to vector<8x16xi32>
    %22 = vector.broadcast %20 : vector<1x16xi32> to vector<8x16xi32>
    %23 = arith.cmpi ne, %21, %22 : vector<8x16xi32>
    %24 = arith.andi %15, %23 : vector<8x16xi1>
    %cst_12 = arith.constant dense<true> : vector<8x16xi1>
    %25 = arith.xori %15, %cst_12 : vector<8x16xi1>
    %cst_13 = arith.constant 1.000000e+30 : f32
    %26 = vector.broadcast %cst_13 : f32 to vector<8x16xf32>
    %27 = arith.select %24, %10, %26 : vector<8x16xi1>, vector<8x16xf32>
    %cst_14 = arith.constant dense<0x7F800000> : vector<8xf32>
    %28 = vector.multi_reduction <minimumf>, %27, %cst_14 [1] : vector<8x16xf32> to vector<8xf32>
    %29 = vector.shape_cast %28 : vector<8xf32> to vector<8x1xf32>
    %cst_15 = arith.constant 1.000000e+30 : f32
    %30 = vector.broadcast %cst_15 : f32 to vector<8x16xf32>
    %31 = arith.select %25, %10, %30 : vector<8x16xi1>, vector<8x16xf32>
    %cst_16 = arith.constant dense<0x7F800000> : vector<8xf32>
    %32 = vector.multi_reduction <minimumf>, %31, %cst_16 [1] : vector<8x16xf32> to vector<8xf32>
    %33 = vector.shape_cast %32 : vector<8xf32> to vector<8x1xf32>
    %cst_17 = arith.constant 0.000000e+00 : f32
    %34 = vector.broadcast %cst_17 : f32 to vector<8x1xf32>
    %35 = arith.maximumf %29, %34 : vector<8x1xf32>
    %36 = math.sqrt %35 : vector<8x1xf32>
    %cst_18 = arith.constant 0.000000e+00 : f32
    %37 = vector.broadcast %cst_18 : f32 to vector<8x1xf32>
    %38 = arith.maximumf %33, %37 : vector<8x1xf32>
    %39 = math.sqrt %38 : vector<8x1xf32>
    %40 = arith.extui %15 : vector<8x16xi1> to vector<8x16xi32>
    %cst_19 = arith.constant dense<0> : vector<8xi32>
    %41 = vector.multi_reduction <add>, %40, %cst_19 [1] : vector<8x16xi32> to vector<8xi32>
    %42 = vector.shape_cast %41 : vector<8xi32> to vector<8x1xi32>
    %c1_i32 = arith.constant 1 : i32
    %43 = vector.broadcast %c1_i32 : i32 to vector<8x1xi32>
    %44 = arith.subi %42, %43 : vector<8x1xi32>
    %c16_i32 = arith.constant 16 : i32
    %45 = vector.broadcast %c16_i32 : i32 to vector<8x1xi32>
    %46 = arith.subi %45, %42 : vector<8x1xi32>
    %c1_i32_20 = arith.constant 1 : i32
    %47 = vector.broadcast %c1_i32_20 : i32 to vector<8x1xi32>
    %48 = arith.cmpi sgt, %44, %47 : vector<8x1xi32>
    %c0_i32 = arith.constant 0 : i32
    %49 = vector.broadcast %c0_i32 : i32 to vector<8x1xi32>
    %50 = arith.cmpi sgt, %46, %49 : vector<8x1xi32>
    %51 = arith.andi %48, %50 : vector<8x1xi1>
    %52 = arith.extui %51 : vector<8x1xi1> to vector<8x1xi32>
    %53 = arith.sitofp %52 : vector<8x1xi32> to vector<8x1xf32>
    %54 = arith.subf %36, %39 : vector<8x1xf32>
    %cst_21 = arith.constant 2.500000e+00 : f32
    %55 = vector.broadcast %cst_21 : f32 to vector<8x1xf32>
    %56 = arith.mulf %54, %55 : vector<8x1xf32>
    %cst_22 = arith.constant 0.000000e+00 : f32
    %57 = vector.broadcast %cst_22 : f32 to vector<8x1xf32>
    %58 = arith.maximumf %56, %57 : vector<8x1xf32>
    %59 = math.absf %56 : vector<8x1xf32>
    %cst_23 = arith.constant 0.000000e+00 : f32
    %60 = vector.broadcast %cst_23 : f32 to vector<8x1xf32>
    %61 = arith.subf %60, %59 : vector<8x1xf32>
    %62 = math.exp %61 : vector<8x1xf32>
    %cst_24 = arith.constant 1.000000e+00 : f32
    %63 = vector.broadcast %cst_24 : f32 to vector<8x1xf32>
    %64 = arith.addf %63, %62 : vector<8x1xf32>
    %65 = math.log %64 : vector<8x1xf32>
    %66 = arith.addf %58, %65 : vector<8x1xf32>
    %67 = arith.mulf %66, %53 : vector<8x1xf32>
    %68 = vector.shape_cast %67 : vector<8x1xf32> to vector<1x8x1xf32>
    %cst_25 = arith.constant dense<0.000000e+00> : vector<1xf32>
    %69 = vector.multi_reduction <add>, %68, %cst_25 [1, 2] : vector<1x8x1xf32> to vector<1xf32>
    %70 = vector.shape_cast %69 : vector<1xf32> to vector<1x1x1xf32>
    %71 = vector.extract %70[0, 0, 0] : f32 from vector<1x1x1xf32>
    %72 = vector.shape_cast %53 : vector<8x1xf32> to vector<1x8x1xf32>
    %cst_26 = arith.constant dense<0.000000e+00> : vector<1xf32>
    %73 = vector.multi_reduction <add>, %72, %cst_26 [1, 2] : vector<1x8x1xf32> to vector<1xf32>
    %74 = vector.shape_cast %73 : vector<1xf32> to vector<1x1x1xf32>
    %75 = vector.extract %74[0, 0, 0] : f32 from vector<1x1x1xf32>
    %76 = tpu.iota {dimensions = array<i32: 2>} : vector<1x1x2xi32>
    %c0_i32_27 = arith.constant 0 : i32
    %77 = vector.broadcast %c0_i32_27 : i32 to vector<1x1x2xi32>
    %78 = arith.cmpi eq, %76, %77 : vector<1x1x2xi32>
    %79 = vector.broadcast %71 : f32 to vector<1x1x2xf32>
    %80 = vector.broadcast %75 : f32 to vector<1x1x2xf32>
    %81 = arith.select %78, %79, %80 : vector<1x1x2xi1>, vector<1x1x2xf32>
    %c0_28 = arith.constant 0 : index
    %c0_29 = arith.constant 0 : index
    %c0_30 = arith.constant 0 : index
    %82 = vector.load %arg7[%c0_28, %c0_29, %c0_30] : memref<1x1x2xf32, #tpu.memory_space<vmem>>, vector<1x1x2xf32>
    tpu.vector_store %arg7[%c0_28, %c0_29, %c0_30], %81 {strides = array<i32>} : memref<1x1x2xf32, #tpu.memory_space<vmem>>, vector<1x1x2xf32>,
    return
  }
  func.func @transform_0(%arg0: i32) -> (i32, i32) {
    %c0_i32 = arith.constant 0 : i32
    %c0_i32_0 = arith.constant 0 : i32
    return %arg0, %c0_i32 : i32, i32
  }
  func.func @transform_1(%arg0: i32) -> (i32, i32) {
    %c0_i32 = arith.constant 0 : i32
    %c0_i32_0 = arith.constant 0 : i32
    %c0_i32_1 = arith.constant 0 : i32
    return %c0_i32, %c0_i32_0 : i32, i32
  }
  func.func @transform_2(%arg0: i32) -> (i32, i32) {
    %c0_i32 = arith.constant 0 : i32
    %c0_i32_0 = arith.constant 0 : i32
    return %arg0, %c0_i32 : i32, i32
  }
  func.func @transform_3(%arg0: i32) -> (i32, i32) {
    %c0_i32 = arith.constant 0 : i32
    %c0_i32_0 = arith.constant 0 : i32
    %c0_i32_1 = arith.constant 0 : i32
    return %c0_i32, %c0_i32_0 : i32, i32
  }
  func.func @transform_4(%arg0: i32) -> (i32, i32) {
    %c0_i32 = arith.constant 0 : i32
    %c0_i32_0 = arith.constant 0 : i32
    return %arg0, %c0_i32 : i32, i32
  }
  func.func @transform_5(%arg0: i32) -> (i32, i32) {
    %c0_i32 = arith.constant 0 : i32
    %c0_i32_0 = arith.constant 0 : i32
    %c0_i32_1 = arith.constant 0 : i32
    return %c0_i32, %c0_i32_0 : i32, i32
  }
  func.func @transform_6(%arg0: i32) -> (i32, i32, i32) {
    %c0_i32 = arith.constant 0 : i32
    %c0_i32_0 = arith.constant 0 : i32
    %c0_i32_1 = arith.constant 0 : i32
    return %arg0, %c0_i32, %c0_i32_0 : i32, i32, i32
  }
}

</mosaic_0001>

<llo_original>
// kernel: tpu_custom_call.1
$region0: #{tpu_custom_call.1}
  #allocation0 [shape = 'u32[]', space=smem, size = 0x4, offset = 0x4, fixed_abs, tag = 'smem constant byte address 0x4 - core index']
  #allocation1 [shape = 'u32[144,128]{1,0:T(1,128)}', space=vmem, size = 0x12000, scoped, tag = 'internal scratch']
  %s0 = inlined_call_operand.vmem [shape: f32[16,32], index: 0, kind: input, shape index: {}]
  %s1 = inlined_call_operand.vmem [shape: f32[32,16], index: 1, kind: input, shape index: {}]
  %s2 = inlined_call_operand.vmem [shape: f32[16,1], index: 2, kind: input, shape index: {}]
  %s3 = inlined_call_operand.vmem [shape: f32[1,16], index: 3, kind: input, shape index: {}]
  %s4 = inlined_call_operand.vmem [shape: s32[16,1], index: 4, kind: input, shape index: {}]
  %s5 = inlined_call_operand.vmem [shape: s32[1,16], index: 5, kind: input, shape index: {}]
  %s6 = inlined_call_operand.hbm [shape: f32[2,1,2], index: 6, kind: output, shape index: {}]
  %s7 = sld [smem:[#allocation0]]
  $region57: #{tpu_custom_call.1} parent=0
    _
  %s9 = ssub.s32 1, %s7
  %s10 = scalar_select 0, %s9, %s7
  $region1: #{tpu_custom_call.1} parent=0
    #allocation2 [shape = 'u8[1024]{0}', space=vmem, size = 0x400, scoped, tag = 'output window, operand 0']
    #allocation3 [shape = 's32[2]{0}', space=sflag, size = 0x8, scoped, tag = 'scoped memory for tpu_custom_call.1']
    %11 = vsyncpa [#allocation3], 0
    %s12 = scalar_lea.sflag [#allocation3], 1
    %13 = vsyncpa %s12, 0
    loop: start=0, step=1, limit=4
    $region2: #{tpu_custom_call.1} parent=1 // loop_pre_header
      _
    $region3: #{tpu_custom_call.1} parent=1 // loop_header
      %s15 = sphi 0, %s19
      %p16 = scmp.ge.s32.totalorder %s15, 4
      %s25 = sphi 0, %s27
      %s28 = sphi 0, %s25
      %s29 = sphi 0, %s28
      %s45 = sphi 0, %s29
      %s49 = sphi 0, %s49
      %s51 = sphi 0, %s49
      %s52 = sphi 0, %s51
      %s66 = sphi 0, %s52
      %s72 = sphi 0, %s74
      %s75 = sphi 0, %s72
      %s76 = sphi 0, %s75
      %s92 = sphi 0, %s76
      %s96 = sphi 0, %s96
      %s98 = sphi 0, %s96
      %s99 = sphi 0, %s98
      %s113 = sphi 0, %s99
      %s119 = sphi 0, %s121
      %s122 = sphi 0, %s119
      %s123 = sphi 0, %s122
      %s139 = sphi 0, %s123
      %s143 = sphi 0, %s143
      %s145 = sphi 0, %s143
      %s146 = sphi 0, %s145
      %s160 = sphi 0, %s146
      %s166 = sphi 0, %s168
      %s169 = sphi 0, %s166
      %s170 = sphi 0, %s169
      %s186 = sphi 0, %s170
    $region4: #{tpu_custom_call.1} parent=1 // loop_header_branch
      %18 = sbr.rel (%p16) target = $region8
    $region5: #{tpu_custom_call.1} parent=1 // loop_body
      %s20 = ssub.s32 %s15, 1
      %s21 = ssub.s32 %s15, 2
      %s22 = sadd.s32 %s15, 1
      %s23 = ssub.s32 %s15, %s22
      %p24 = scmp.eq.s32.totalorder %s23, 0
      %s26 = sadd.s32 %s25, 1
      %s27 = scalar_select %p24, %s25, %s26
      %p30 = pneg %p24
      %p31 = scmp.eq.s32.totalorder %s15, 1
      %p32 = por %p30, %p31
      %p33 = scmp.ne.s32.totalorder %s25, %s28
      %p34 = scmp.eq.s32.totalorder %s15, 0
      %p35 = por %p33, %p34
      %p36 = scmp.ne.s32.totalorder %s25, %s28
      %p37 = scmp.eq.s32.totalorder %s20, 1
      %p38 = por %p36, %p37
      %p39 = scmp.ne.s32.totalorder %s28, %s29
      %p40 = scmp.eq.s32.totalorder %s20, 0
      %p41 = por %p39, %p40
      %p42 = scmp.ne.s32.totalorder %s28, %s29
      %p43 = scmp.eq.s32.totalorder %s21, 1
      %p44 = por %p42, %p43
      %p46 = scmp.ne.s32.totalorder %s29, %s45
      %p47 = scmp.eq.s32.totalorder %s21, 0
      %p48 = por %p46, %p47
      %s50 = sadd.s32 %s49, 1
      %p53 = scmp.eq.s32.totalorder %s15, 1
      %p54 = scmp.ne.s32.totalorder %s49, %s51
      %p55 = scmp.eq.s32.totalorder %s15, 0
      %p56 = por %p54, %p55
      %p57 = scmp.ne.s32.totalorder %s49, %s51
      %p58 = scmp.eq.s32.totalorder %s20, 1
      %p59 = por %p57, %p58
      %p60 = scmp.ne.s32.totalorder %s51, %s52
      %p61 = scmp.eq.s32.totalorder %s20, 0
      %p62 = por %p60, %p61
      %p63 = scmp.ne.s32.totalorder %s51, %s52
      %p64 = scmp.eq.s32.totalorder %s21, 1
      %p65 = por %p63, %p64
      %p67 = scmp.ne.s32.totalorder %s52, %s66
      %p68 = scmp.eq.s32.totalorder %s21, 0
      %p69 = por %p67, %p68
      %s70 = ssub.s32 %s15, %s22
      %p71 = scmp.eq.s32.totalorder %s70, 0
      %s73 = sadd.s32 %s72, 1
      %s74 = scalar_select %p71, %s72, %s73
      %p77 = pneg %p71
      %p78 = scmp.eq.s32.totalorder %s15, 1
      %p79 = por %p77, %p78
      %p80 = scmp.ne.s32.totalorder %s72, %s75
      %p81 = scmp.eq.s32.totalorder %s15, 0
      %p82 = por %p80, %p81
      %p83 = scmp.ne.s32.totalorder %s72, %s75
      %p84 = scmp.eq.s32.totalorder %s20, 1
      %p85 = por %p83, %p84
      %p86 = scmp.ne.s32.totalorder %s75, %s76
      %p87 = scmp.eq.s32.totalorder %s20, 0
      %p88 = por %p86, %p87
      %p89 = scmp.ne.s32.totalorder %s75, %s76
      %p90 = scmp.eq.s32.totalorder %s21, 1
      %p91 = por %p89, %p90
      %p93 = scmp.ne.s32.totalorder %s76, %s92
      %p94 = scmp.eq.s32.totalorder %s21, 0
      %p95 = por %p93, %p94
      %s97 = sadd.s32 %s96, 1
      %p100 = scmp.eq.s32.totalorder %s15, 1
      %p101 = scmp.ne.s32.totalorder %s96, %s98
      %p102 = scmp.eq.s32.totalorder %s15, 0
      %p103 = por %p101, %p102
      %p104 = scmp.ne.s32.totalorder %s96, %s98
      %p105 = scmp.eq.s32.totalorder %s20, 1
      %p106 = por %p104, %p105
      %p107 = scmp.ne.s32.totalorder %s98, %s99
      %p108 = scmp.eq.s32.totalorder %s20, 0
      %p109 = por %p107, %p108
      %p110 = scmp.ne.s32.totalorder %s98, %s99
      %p111 = scmp.eq.s32.totalorder %s21, 1
      %p112 = por %p110, %p111
      %p114 = scmp.ne.s32.totalorder %s99, %s113
      %p115 = scmp.eq.s32.totalorder %s21, 0
      %p116 = por %p114, %p115
      %s117 = ssub.s32 %s15, %s22
      %p118 = scmp.eq.s32.totalorder %s117, 0
      %s120 = sadd.s32 %s119, 1
      %s121 = scalar_select %p118, %s119, %s120
      %p124 = pneg %p118
      %p125 = scmp.eq.s32.totalorder %s15, 1
      %p126 = por %p124, %p125
      %p127 = scmp.ne.s32.totalorder %s119, %s122
      %p128 = scmp.eq.s32.totalorder %s15, 0
      %p129 = por %p127, %p128
      %p130 = scmp.ne.s32.totalorder %s119, %s122
      %p131 = scmp.eq.s32.totalorder %s20, 1
      %p132 = por %p130, %p131
      %p133 = scmp.ne.s32.totalorder %s122, %s123
      %p134 = scmp.eq.s32.totalorder %s20, 0
      %p135 = por %p133, %p134
      %p136 = scmp.ne.s32.totalorder %s122, %s123
      %p137 = scmp.eq.s32.totalorder %s21, 1
      %p138 = por %p136, %p137
      %p140 = scmp.ne.s32.totalorder %s123, %s139
      %p141 = scmp.eq.s32.totalorder %s21, 0
      %p142 = por %p140, %p141
      %s144 = sadd.s32 %s143, 1
      %p147 = scmp.eq.s32.totalorder %s15, 1
      %p148 = scmp.ne.s32.totalorder %s143, %s145
      %p149 = scmp.eq.s32.totalorder %s15, 0
      %p150 = por %p148, %p149
      %p151 = scmp.ne.s32.totalorder %s143, %s145
      %p152 = scmp.eq.s32.totalorder %s20, 1
      %p153 = por %p151, %p152
      %p154 = scmp.ne.s32.totalorder %s145, %s146
      %p155 = scmp.eq.s32.totalorder %s20, 0
      %p156 = por %p154, %p155
      %p157 = scmp.ne.s32.totalorder %s145, %s146
      %p158 = scmp.eq.s32.totalorder %s21, 1
      %p159 = por %p157, %p158
      %p161 = scmp.ne.s32.totalorder %s146, %s160
      %p162 = scmp.eq.s32.totalorder %s21, 0
      %p163 = por %p161, %p162
      %s164 = ssub.s32 %s15, %s22
      %p165 = scmp.eq.s32.totalorder %s164, 0
      %s167 = sadd.s32 %s166, 1
      %s168 = scalar_select %p165, %s166, %s167
      %p171 = pneg %p165
      %p172 = scmp.eq.s32.totalorder %s15, 1
      %p173 = por %p171, %p172
      %p174 = scmp.ne.s32.totalorder %s166, %s169
      %p175 = scmp.eq.s32.totalorder %s15, 0
      %p176 = por %p174, %p175
      %p177 = scmp.ne.s32.totalorder %s166, %s169
      %p178 = scmp.eq.s32.totalorder %s20, 1
      %p179 = por %p177, %p178
      %p180 = scmp.ne.s32.totalorder %s169, %s170
      %p181 = scmp.eq.s32.totalorder %s20, 0
      %p182 = por %p180, %p181
      %p183 = scmp.ne.s32.totalorder %s169, %s170
      %p184 = scmp.eq.s32.totalorder %s21, 1
      %p185 = por %p183, %p184
      %p187 = scmp.ne.s32.totalorder %s170, %s186
      %p188 = scmp.eq.s32.totalorder %s21, 0
      %p189 = por %p187, %p188
      %p190 = scmp.le.s32.totalorder 1, %s15
      %p191 = scmp.lt.s32.totalorder %s15, 3
      %p192 = pnand %p190, %p191
      %p193 = pneg %p192
      // Predicated region
      $region9: #{tpu_custom_call.1} parent=5 // pred_check
        _
      $region10: #{tpu_custom_call.1} parent=5 // pred_check_branch
        %195 = sbr.rel (%p192) target = $region12
      $region11: #{tpu_custom_call.1} parent=5 // pred_region
        %s196 = ssub.s32 %s15, 1
        // Predicated region
        $region13: #{tpu_custom_call.1} parent=11 // pred_check
          %p197 = pneg %p62
        $region14: #{tpu_custom_call.1} parent=11 // pred_check_branch
          %199 = sbr.rel (%p197) target = $region16
        $region15: #{tpu_custom_call.1} parent=11 // pred_region
          _
        $region16: #{tpu_custom_call.1} parent=11 // pred_fallthru
          _
        // Predicated region
        $region17: #{tpu_custom_call.1} parent=11 // pred_check
          %p200 = pneg %p109
        $region18: #{tpu_custom_call.1} parent=11 // pred_check_branch
          %202 = sbr.rel (%p200) target = $region20
        $region19: #{tpu_custom_call.1} parent=11 // pred_region
          _
        $region20: #{tpu_custom_call.1} parent=11 // pred_fallthru
          _
        // Predicated region
        $region21: #{tpu_custom_call.1} parent=11 // pred_check
          %p203 = pneg %p156
        $region22: #{tpu_custom_call.1} parent=11 // pred_check_branch
          %205 = sbr.rel (%p203) target = $region24
        $region23: #{tpu_custom_call.1} parent=11 // pred_region
          _
        $region24: #{tpu_custom_call.1} parent=11 // pred_fallthru
          _
      $region12: #{tpu_custom_call.1} parent=5 // pred_fallthru
        _
      %p206 = scmp.lt.s32.totalorder %s15, 2
      // Predicated region
      $region25: #{tpu_custom_call.1} parent=5 // pred_check
        %p207 = pneg %p206
      $region26: #{tpu_custom_call.1} parent=5 // pred_check_branch
        %209 = sbr.rel (%p207) target = $region28
      $region27: #{tpu_custom_call.1} parent=5 // pred_region
        // Predicated region
        $region29: #{tpu_custom_call.1} parent=27 // pred_check
          %p210 = pneg %p35
        $region30: #{tpu_custom_call.1} parent=27 // pred_check_branch
          %212 = sbr.rel (%p210) target = $region32
        $region31: #{tpu_custom_call.1} parent=27 // pred_region
          %p213 = scmp.lt.s32.totalorder %s15, 1
          %s214 = scalar_select %p213, %s15, 1
          %s215 = smul.addr %s214, 8
          %s216 = scalar_lea.vmem %s0, %s215
        $region32: #{tpu_custom_call.1} parent=27 // pred_fallthru
          _
        // Predicated region
        $region33: #{tpu_custom_call.1} parent=27 // pred_check
          %p217 = pneg %p82
        $region34: #{tpu_custom_call.1} parent=27 // pred_check_branch
          %219 = sbr.rel (%p217) target = $region36
        $region35: #{tpu_custom_call.1} parent=27 // pred_region
          %p220 = scmp.lt.s32.totalorder %s15, 1
          %s221 = scalar_select %p220, %s15, 1
          %s222 = smul.addr %s221, 8
          %s223 = scalar_lea.vmem %s2, %s222
        $region36: #{tpu_custom_call.1} parent=27 // pred_fallthru
          _
        // Predicated region
        $region37: #{tpu_custom_call.1} parent=27 // pred_check
          %p224 = pneg %p129
        $region38: #{tpu_custom_call.1} parent=27 // pred_check_branch
          %226 = sbr.rel (%p224) target = $region40
        $region39: #{tpu_custom_call.1} parent=27 // pred_region
          %p227 = scmp.lt.s32.totalorder %s15, 1
          %s228 = scalar_select %p227, %s15, 1
          %s229 = smul.addr %s228, 8
          %s230 = scalar_lea.vmem %s4, %s229
        $region40: #{tpu_custom_call.1} parent=27 // pred_fallthru
          _
      $region28: #{tpu_custom_call.1} parent=5 // pred_fallthru
        _
      %p231 = scmp.le.s32.totalorder 1, %s15
      %p232 = scmp.lt.s32.totalorder %s15, 3
      %p233 = pnand %p231, %p232
      %p234 = pneg %p233
      // Predicated region
      $region41: #{tpu_custom_call.1} parent=5 // pred_check
        _
      $region42: #{tpu_custom_call.1} parent=5 // pred_check_branch
        %236 = sbr.rel (%p233) target = $region44
      $region43: #{tpu_custom_call.1} parent=5 // pred_region
        %s237 = ssub.s32 %s15, 1
        %p238 = scmp.lt.s32.totalorder %s20, 1
        %s239 = scalar_select %p238, %s20, 1
        %s240 = smul.addr %s239, 8
        %s241 = scalar_lea.vmem %s0, %s240
        %p242 = pneg %p41
        %p243 = pneg %p38
        %p244 = pneg %p62
        %p245 = pneg %p59
        %p246 = scmp.lt.s32.totalorder %s20, 1
        %s247 = scalar_select %p246, %s20, 1
        %s248 = smul.addr %s247, 8
        %s249 = scalar_lea.vmem %s2, %s248
        %p250 = pneg %p88
        %p251 = pneg %p85
        %p252 = pneg %p109
        %p253 = pneg %p106
        %p254 = scmp.lt.s32.totalorder %s20, 1
        %s255 = scalar_select %p254, %s20, 1
        %s256 = smul.addr %s255, 8
        %s257 = scalar_lea.vmem %s4, %s256
        %p258 = pneg %p135
        %p259 = pneg %p132
        %p260 = pneg %p156
        %p261 = pneg %p153
        %p262 = pneg %p182
        %p263 = pneg %p179
        %s264 = sand.u32 %s169, 1
        %s265 = scalar_lea.sflag [#allocation3], %s264
        %s266 = sand.u32 %s169, 1
        %s267 = scalar_lea.vmem [#allocation2], %s266
        %p268 = scmp.lt.s32.totalorder %s20, 1
        %s269 = scalar_select %p268, %s20, 1
        %s270 = smul.addr %s269, 8
        %s271 = scalar_lea.vmem %s0, %s270
        %p272 = scmp.lt.s32.totalorder %s20, 1
        %s273 = scalar_select %p272, %s20, 1
        %s274 = smul.addr %s273, 8
        %s275 = scalar_lea.vmem %s2, %s274
        %p276 = scmp.lt.s32.totalorder %s20, 1
        %s277 = scalar_select %p276, %s20, 1
        %s278 = smul.addr %s277, 8
        %s279 = scalar_lea.vmem %s4, %s278
        %v280 = vld [vmem:[%s271] sm:$0xff]
        %v281 = vld [vmem:[%s1] sm:$0xff]
        %v282 = vld [vmem:[%s1 + $0x8] sm:$0xff]
        %v283 = vld [vmem:[%s1 + $0x10] sm:$0xff]
        %v284 = vld [vmem:[%s1 + $0x18] sm:$0xff]
        %vm285 = vcmask 261120
        %v287 = vsel %vm285, %v280, 0
        %289 = vmatprep.subr.mxu0 0.0
        %290 = vmatpush1.msra.mxu0 0.0
        %291 = vmatprep.subr.mxu0 0.0
        %292 = vmatpush1.msra.mxu0 0.0
        %293 = vmatprep.subr.mxu0 0.0
        %294 = vmatpush1.msra.mxu0 0.0
        %295 = vmatprep.subr.mxu0 0.0
        %296 = vmatpush1.msra.mxu0 0.0
        %297 = vmatprep.subr.mxu0 0.0
        %298 = vmatpush1.msra.mxu0 0.0
        %299 = vmatprep.subr.mxu0 0.0
        %300 = vmatpush1.msra.mxu0 0.0
        %301 = vmatprep.subr.mxu0 0.0
        %302 = vmatpush1.msra.mxu0 0.0
        %303 = vmatprep.subr.mxu0 0.0
        %304 = vmatpush1.msra.mxu0 0.0
        %305 = vmatprep.subr.mxu0 0.0
        %306 = vmatpush1.msra.mxu0 0.0
        %307 = vmatprep.subr.mxu0 0.0
        %308 = vmatpush1.msra.mxu0 0.0
        %309 = vmatprep.subr.mxu0 0.0
        %310 = vmatpush1.msra.mxu0 0.0
        %311 = vmatprep.subr.mxu0 0.0
        %312 = vmatpush1.msra.mxu0 0.0
        %313 = vmatprep.subr.mxu0 0.0
        %v314 = vand.u32 %v284, 4294901760
        %315 = vmatpush1.msra.mxu0 %v314
        %316 = vmatprep.subr.mxu0 0.0
        %v317 = vand.u32 %v283, 4294901760
        %318 = vmatpush1.msra.mxu0 %v317
        %319 = vmatprep.subr.mxu0 0.0
        %v320 = vand.u32 %v282, 4294901760
        %321 = vmatpush1.msra.mxu0 %v320
        %322 = vmatprep.subr.mxu0 0.0
        %v323 = vand.u32 %v281, 4294901760
        %324 = vmatpush1.msra.mxu0 %v323
        %325 = vmatprep.subr.mxu0 0.0
        %326 = vmatpush2.msra.mxu0 0.0
        %327 = vmatprep.subr.mxu0 0.0
        %328 = vmatpush2.msra.mxu0 0.0
        %329 = vmatprep.subr.mxu0 0.0
        %330 = vmatpush2.msra.mxu0 0.0
        %331 = vmatprep.subr.mxu0 0.0
        %332 = vmatpush2.msra.mxu0 0.0
        %333 = vmatprep.subr.mxu0 0.0
        %334 = vmatpush2.msra.mxu0 0.0
        %335 = vmatprep.subr.mxu0 0.0
        %336 = vmatpush2.msra.mxu0 0.0
        %337 = vmatprep.subr.mxu0 0.0
        %338 = vmatpush2.msra.mxu0 0.0
        %339 = vmatprep.subr.mxu0 0.0
        %340 = vmatpush2.msra.mxu0 0.0
        %341 = vmatprep.subr.mxu0 0.0
        %342 = vmatpush2.msra.mxu0 0.0
        %343 = vmatprep.subr.mxu0 0.0
        %344 = vmatpush2.msra.mxu0 0.0
        %345 = vmatprep.subr.mxu0 0.0
        %346 = vmatpush2.msra.mxu0 0.0
        %347 = vmatprep.subr.mxu0 0.0
        %348 = vmatpush2.msra.mxu0 0.0
        %349 = vmatprep.subr.mxu0 0.0
        %350 = vmatpush2.msra.mxu0 0.0
        %351 = vmatprep.subr.mxu0 0.0
        %352 = vmatpush2.msra.mxu0 0.0
        %353 = vmatprep.subr.mxu0 0.0
        %354 = vmatpush2.msra.mxu0 0.0
        %355 = vmatprep.subr.mxu0 0.0
        %356 = vmatpush2.msra.mxu0 0.0
        %357 = vmatprep.mubr.f32.mxu0 0.0
        %v358 = vand.u32 %v287, 4294901760
        %v359 = vsub.f32 %v287, %v358
        %v360 = vand.u32 %v359, 4294901760
        %v361 = vsub.f32 %v359, %v360
        %v362 = vand.u32 %v361, 4294901760
        %363 = vmatmul.mubr.f32.gmra.mxu0 %v362
        %v364 = vpop.f32.mrf.mxu0
        %v365 = vadd.f32 0.0, %v364
        %v366 = vpop.f32.mrf.mxu0
        %367 = vdwg.mxu0
        %368 = vmatprep.subr.mxu0 0.0
        %369 = vmatpush1.msra.mxu0 0.0
        %370 = vmatprep.subr.mxu0 0.0
        %371 = vmatpush1.msra.mxu0 0.0
        %372 = vmatprep.subr.mxu0 0.0
        %373 = vmatpush1.msra.mxu0 0.0
        %374 = vmatprep.subr.mxu0 0.0
        %375 = vmatpush1.msra.mxu0 0.0
        %376 = vmatprep.subr.mxu0 0.0
        %377 = vmatpush1.msra.mxu0 0.0
        %378 = vmatprep.subr.mxu0 0.0
        %379 = vmatpush1.msra.mxu0 0.0
        %380 = vmatprep.subr.mxu0 0.0
        %381 = vmatpush1.msra.mxu0 0.0
        %382 = vmatprep.subr.mxu0 0.0
        %383 = vmatpush1.msra.mxu0 0.0
        %384 = vmatprep.subr.mxu0 0.0
        %385 = vmatpush1.msra.mxu0 0.0
        %386 = vmatprep.subr.mxu0 0.0
        %387 = vmatpush1.msra.mxu0 0.0
        %388 = vmatprep.subr.mxu0 0.0
        %389 = vmatpush1.msra.mxu0 0.0
        %390 = vmatprep.subr.mxu0 0.0
        %391 = vmatpush1.msra.mxu0 0.0
        %392 = vmatprep.subr.mxu0 0.0
        %v393 = vand.u32 %v284, 4294901760
        %v394 = vsub.f32 %v284, %v393
        %v395 = vand.u32 %v394, 4294901760
        %v396 = vsub.f32 %v394, %v395
        %v397 = vand.u32 %v396, 4294901760
        %398 = vmatpush1.msra.mxu0 %v397
        %399 = vmatprep.subr.mxu0 0.0
        %v400 = vand.u32 %v283, 4294901760
        %v401 = vsub.f32 %v283, %v400
        %v402 = vand.u32 %v401, 4294901760
        %v403 = vsub.f32 %v401, %v402
        %v404 = vand.u32 %v403, 4294901760
        %405 = vmatpush1.msra.mxu0 %v404
        %406 = vmatprep.subr.mxu0 0.0
        %v407 = vand.u32 %v282, 4294901760
        %v408 = vsub.f32 %v282, %v407
        %v409 = vand.u32 %v408, 4294901760
        %v410 = vsub.f32 %v408, %v409
        %v411 = vand.u32 %v410, 4294901760
        %412 = vmatpush1.msra.mxu0 %v411
        %413 = vmatprep.subr.mxu0 0.0
        %v414 = vand.u32 %v281, 4294901760
        %v415 = vsub.f32 %v281, %v414
        %v416 = vand.u32 %v415, 4294901760
        %v417 = vsub.f32 %v415, %v416
        %v418 = vand.u32 %v417, 4294901760
        %419 = vmatpush1.msra.mxu0 %v418
        %420 = vmatprep.subr.mxu0 0.0
        %421 = vmatpush2.msra.mxu0 0.0
        %422 = vmatprep.subr.mxu0 0.0
        %423 = vmatpush2.msra.mxu0 0.0
        %424 = vmatprep.subr.mxu0 0.0
        %425 = vmatpush2.msra.mxu0 0.0
        %426 = vmatprep.subr.mxu0 0.0
        %427 = vmatpush2.msra.mxu0 0.0
        %428 = vmatprep.subr.mxu0 0.0
        %429 = vmatpush2.msra.mxu0 0.0
        %430 = vmatprep.subr.mxu0 0.0
        %431 = vmatpush2.msra.mxu0 0.0
        %432 = vmatprep.subr.mxu0 0.0
        %433 = vmatpush2.msra.mxu0 0.0
        %434 = vmatprep.subr.mxu0 0.0
        %435 = vmatpush2.msra.mxu0 0.0
        %436 = vmatprep.subr.mxu0 0.0
        %437 = vmatpush2.msra.mxu0 0.0
        %438 = vmatprep.subr.mxu0 0.0
        %439 = vmatpush2.msra.mxu0 0.0
        %440 = vmatprep.subr.mxu0 0.0
        %441 = vmatpush2.msra.mxu0 0.0
        %442 = vmatprep.subr.mxu0 0.0
        %443 = vmatpush2.msra.mxu0 0.0
        %444 = vmatprep.subr.mxu0 0.0
        %445 = vmatpush2.msra.mxu0 0.0
        %446 = vmatprep.subr.mxu0 0.0
        %447 = vmatpush2.msra.mxu0 0.0
        %448 = vmatprep.subr.mxu0 0.0
        %449 = vmatpush2.msra.mxu0 0.0
        %450 = vmatprep.subr.mxu0 0.0
        %451 = vmatpush2.msra.mxu0 0.0
        %452 = vmatprep.mubr.f32.mxu0 0.0
        %v453 = vand.u32 %v287, 4294901760
        %454 = vmatmul.mubr.f32.gmra.mxu0 %v453
        %v455 = vpop.f32.mrf.mxu0
        %v456 = vadd.f32 %v365, %v455
        %v457 = vpop.f32.mrf.mxu0
        %458 = vdwg.mxu0
        %459 = vmatprep.subr.mxu0 0.0
        %460 = vmatpush1.msra.mxu0 0.0
        %461 = vmatprep.subr.mxu0 0.0
        %462 = vmatpush1.msra.mxu0 0.0
        %463 = vmatprep.subr.mxu0 0.0
        %464 = vmatpush1.msra.mxu0 0.0
        %465 = vmatprep.subr.mxu0 0.0
        %466 = vmatpush1.msra.mxu0 0.0
        %467 = vmatprep.subr.mxu0 0.0
        %468 = vmatpush1.msra.mxu0 0.0
        %469 = vmatprep.subr.mxu0 0.0
        %470 = vmatpush1.msra.mxu0 0.0
        %471 = vmatprep.subr.mxu0 0.0
        %472 = vmatpush1.msra.mxu0 0.0
        %473 = vmatprep.subr.mxu0 0.0
        %474 = vmatpush1.msra.mxu0 0.0
        %475 = vmatprep.subr.mxu0 0.0
        %476 = vmatpush1.msra.mxu0 0.0
        %477 = vmatprep.subr.mxu0 0.0
        %478 = vmatpush1.msra.mxu0 0.0
        %479 = vmatprep.subr.mxu0 0.0
        %480 = vmatpush1.msra.mxu0 0.0
        %481 = vmatprep.subr.mxu0 0.0
        %482 = vmatpush1.msra.mxu0 0.0
        %483 = vmatprep.subr.mxu0 0.0
        %v484 = vand.u32 %v284, 4294901760
        %v485 = vsub.f32 %v284, %v484
        %486 = vmatpush1.msra.mxu0 %v485
        %487 = vmatprep.subr.mxu0 0.0
        %v488 = vand.u32 %v283, 4294901760
        %v489 = vsub.f32 %v283, %v488
        %490 = vmatpush1.msra.mxu0 %v489
        %491 = vmatprep.subr.mxu0 0.0
        %v492 = vand.u32 %v282, 4294901760
        %v493 = vsub.f32 %v282, %v492
        %494 = vmatpush1.msra.mxu0 %v493
        %495 = vmatprep.subr.mxu0 0.0
        %v496 = vand.u32 %v281, 4294901760
        %v497 = vsub.f32 %v281, %v496
        %498 = vmatpush1.msra.mxu0 %v497
        %499 = vmatprep.subr.mxu0 0.0
        %500 = vmatpush2.msra.mxu0 0.0
        %501 = vmatprep.subr.mxu0 0.0
        %502 = vmatpush2.msra.mxu0 0.0
        %503 = vmatprep.subr.mxu0 0.0
        %504 = vmatpush2.msra.mxu0 0.0
        %505 = vmatprep.subr.mxu0 0.0
        %506 = vmatpush2.msra.mxu0 0.0
        %507 = vmatprep.subr.mxu0 0.0
        %508 = vmatpush2.msra.mxu0 0.0
        %509 = vmatprep.subr.mxu0 0.0
        %510 = vmatpush2.msra.mxu0 0.0
        %511 = vmatprep.subr.mxu0 0.0
        %512 = vmatpush2.msra.mxu0 0.0
        %513 = vmatprep.subr.mxu0 0.0
        %514 = vmatpush2.msra.mxu0 0.0
        %515 = vmatprep.subr.mxu0 0.0
        %516 = vmatpush2.msra.mxu0 0.0
        %517 = vmatprep.subr.mxu0 0.0
        %518 = vmatpush2.msra.mxu0 0.0
        %519 = vmatprep.subr.mxu0 0.0
        %520 = vmatpush2.msra.mxu0 0.0
        %521 = vmatprep.subr.mxu0 0.0
        %522 = vmatpush2.msra.mxu0 0.0
        %523 = vmatprep.subr.mxu0 0.0
        %524 = vmatpush2.msra.mxu0 0.0
        %525 = vmatprep.subr.mxu0 0.0
        %526 = vmatpush2.msra.mxu0 0.0
        %527 = vmatprep.subr.mxu0 0.0
        %528 = vmatpush2.msra.mxu0 0.0
        %529 = vmatprep.subr.mxu0 0.0
        %530 = vmatpush2.msra.mxu0 0.0
        %531 = vmatprep.mubr.f32.mxu0 0.0
        %v532 = vand.u32 %v287, 4294901760
        %v533 = vsub.f32 %v287, %v532
        %534 = vmatmul.mubr.f32.gmra.mxu0 %v533
        %v535 = vpop.f32.mrf.mxu0
        %v536 = vadd.f32 %v456, %v535
        %v537 = vpop.f32.mrf.mxu0
        %538 = vdwg.mxu0
        %539 = vmatprep.subr.mxu0 0.0
        %540 = vmatpush1.msra.mxu0 0.0
        %541 = vmatprep.subr.mxu0 0.0
        %542 = vmatpush1.msra.mxu0 0.0
        %543 = vmatprep.subr.mxu0 0.0
        %544 = vmatpush1.msra.mxu0 0.0
        %545 = vmatprep.subr.mxu0 0.0
        %546 = vmatpush1.msra.mxu0 0.0
        %547 = vmatprep.subr.mxu0 0.0
        %548 = vmatpush1.msra.mxu0 0.0
        %549 = vmatprep.subr.mxu0 0.0
        %550 = vmatpush1.msra.mxu0 0.0
        %551 = vmatprep.subr.mxu0 0.0
        %552 = vmatpush1.msra.mxu0 0.0
        %553 = vmatprep.subr.mxu0 0.0
        %554 = vmatpush1.msra.mxu0 0.0
        %555 = vmatprep.subr.mxu0 0.0
        %556 = vmatpush1.msra.mxu0 0.0
        %557 = vmatprep.subr.mxu0 0.0
        %558 = vmatpush1.msra.mxu0 0.0
        %559 = vmatprep.subr.mxu0 0.0
        %560 = vmatpush1.msra.mxu0 0.0
        %561 = vmatprep.subr.mxu0 0.0
        %562 = vmatpush1.msra.mxu0 0.0
        %563 = vmatprep.subr.mxu0 0.0
        %v564 = vand.u32 %v284, 4294901760
        %565 = vmatpush1.msra.mxu0 %v564
        %566 = vmatprep.subr.mxu0 0.0
        %v567 = vand.u32 %v283, 4294901760
        %568 = vmatpush1.msra.mxu0 %v567
        %569 = vmatprep.subr.mxu0 0.0
        %v570 = vand.u32 %v282, 4294901760
        %571 = vmatpush1.msra.mxu0 %v570
        %572 = vmatprep.subr.mxu0 0.0
        %v573 = vand.u32 %v281, 4294901760
        %574 = vmatpush1.msra.mxu0 %v573
        %575 = vmatprep.subr.mxu0 0.0
        %576 = vmatpush2.msra.mxu0 0.0
        %577 = vmatprep.subr.mxu0 0.0
        %578 = vmatpush2.msra.mxu0 0.0
        %579 = vmatprep.subr.mxu0 0.0
        %580 = vmatpush2.msra.mxu0 0.0
        %581 = vmatprep.subr.mxu0 0.0
        %582 = vmatpush2.msra.mxu0 0.0
        %583 = vmatprep.subr.mxu0 0.0
        %584 = vmatpush2.msra.mxu0 0.0
        %585 = vmatprep.subr.mxu0 0.0
        %586 = vmatpush2.msra.mxu0 0.0
        %587 = vmatprep.subr.mxu0 0.0
        %588 = vmatpush2.msra.mxu0 0.0
        %589 = vmatprep.subr.mxu0 0.0
        %590 = vmatpush2.msra.mxu0 0.0
        %591 = vmatprep.subr.mxu0 0.0
        %592 = vmatpush2.msra.mxu0 0.0
        %593 = vmatprep.subr.mxu0 0.0
        %594 = vmatpush2.msra.mxu0 0.0
        %595 = vmatprep.subr.mxu0 0.0
        %596 = vmatpush2.msra.mxu0 0.0
        %597 = vmatprep.subr.mxu0 0.0
        %598 = vmatpush2.msra.mxu0 0.0
        %599 = vmatprep.subr.mxu0 0.0
        %600 = vmatpush2.msra.mxu0 0.0
        %601 = vmatprep.subr.mxu0 0.0
        %602 = vmatpush2.msra.mxu0 0.0
        %603 = vmatprep.subr.mxu0 0.0
        %604 = vmatpush2.msra.mxu0 0.0
        %605 = vmatprep.subr.mxu0 0.0
        %606 = vmatpush2.msra.mxu0 0.0
        %607 = vmatprep.mubr.f32.mxu0 0.0
        %v608 = vand.u32 %v287, 4294901760
        %v609 = vsub.f32 %v287, %v608
        %v610 = vand.u32 %v609, 4294901760
        %611 = vmatmul.mubr.f32.gmra.mxu0 %v610
        %v612 = vpop.f32.mrf.mxu0
        %v613 = vadd.f32 %v536, %v612
        %v614 = vpop.f32.mrf.mxu0
        %615 = vdwg.mxu0
        %616 = vmatprep.subr.mxu0 0.0
        %617 = vmatpush1.msra.mxu0 0.0
        %618 = vmatprep.subr.mxu0 0.0
        %619 = vmatpush1.msra.mxu0 0.0
        %620 = vmatprep.subr.mxu0 0.0
        %621 = vmatpush1.msra.mxu0 0.0
        %622 = vmatprep.subr.mxu0 0.0
        %623 = vmatpush1.msra.mxu0 0.0
        %624 = vmatprep.subr.mxu0 0.0
        %625 = vmatpush1.msra.mxu0 0.0
        %626 = vmatprep.subr.mxu0 0.0
        %627 = vmatpush1.msra.mxu0 0.0
        %628 = vmatprep.subr.mxu0 0.0
        %629 = vmatpush1.msra.mxu0 0.0
        %630 = vmatprep.subr.mxu0 0.0
        %631 = vmatpush1.msra.mxu0 0.0
        %632 = vmatprep.subr.mxu0 0.0
        %633 = vmatpush1.msra.mxu0 0.0
        %634 = vmatprep.subr.mxu0 0.0
        %635 = vmatpush1.msra.mxu0 0.0
        %636 = vmatprep.subr.mxu0 0.0
        %637 = vmatpush1.msra.mxu0 0.0
        %638 = vmatprep.subr.mxu0 0.0
        %639 = vmatpush1.msra.mxu0 0.0
        %640 = vmatprep.subr.mxu0 0.0
        %v641 = vand.u32 %v284, 4294901760
        %v642 = vsub.f32 %v284, %v641
        %v643 = vand.u32 %v642, 4294901760
        %644 = vmatpush1.msra.mxu0 %v643
        %645 = vmatprep.subr.mxu0 0.0
        %v646 = vand.u32 %v283, 4294901760
        %v647 = vsub.f32 %v283, %v646
        %v648 = vand.u32 %v647, 4294901760
        %649 = vmatpush1.msra.mxu0 %v648
        %650 = vmatprep.subr.mxu0 0.0
        %v651 = vand.u32 %v282, 4294901760
        %v652 = vsub.f32 %v282, %v651
        %v653 = vand.u32 %v652, 4294901760
        %654 = vmatpush1.msra.mxu0 %v653
        %655 = vmatprep.subr.mxu0 0.0
        %v656 = vand.u32 %v281, 4294901760
        %v657 = vsub.f32 %v281, %v656
        %v658 = vand.u32 %v657, 4294901760
        %659 = vmatpush1.msra.mxu0 %v658
        %660 = vmatprep.subr.mxu0 0.0
        %661 = vmatpush2.msra.mxu0 0.0
        %662 = vmatprep.subr.mxu0 0.0
        %663 = vmatpush2.msra.mxu0 0.0
        %664 = vmatprep.subr.mxu0 0.0
        %665 = vmatpush2.msra.mxu0 0.0
        %666 = vmatprep.subr.mxu0 0.0
        %667 = vmatpush2.msra.mxu0 0.0
        %668 = vmatprep.subr.mxu0 0.0
        %669 = vmatpush2.msra.mxu0 0.0
        %670 = vmatprep.subr.mxu0 0.0
        %671 = vmatpush2.msra.mxu0 0.0
        %672 = vmatprep.subr.mxu0 0.0
        %673 = vmatpush2.msra.mxu0 0.0
        %674 = vmatprep.subr.mxu0 0.0
        %675 = vmatpush2.msra.mxu0 0.0
        %676 = vmatprep.subr.mxu0 0.0
        %677 = vmatpush2.msra.mxu0 0.0
        %678 = vmatprep.subr.mxu0 0.0
        %679 = vmatpush2.msra.mxu0 0.0
        %680 = vmatprep.subr.mxu0 0.0
        %681 = vmatpush2.msra.mxu0 0.0
        %682 = vmatprep.subr.mxu0 0.0
        %683 = vmatpush2.msra.mxu0 0.0
        %684 = vmatprep.subr.mxu0 0.0
        %685 = vmatpush2.msra.mxu0 0.0
        %686 = vmatprep.subr.mxu0 0.0
        %687 = vmatpush2.msra.mxu0 0.0
        %688 = vmatprep.subr.mxu0 0.0
        %689 = vmatpush2.msra.mxu0 0.0
        %690 = vmatprep.subr.mxu0 0.0
        %691 = vmatpush2.msra.mxu0 0.0
        %692 = vmatprep.mubr.f32.mxu0 0.0
        %v693 = vand.u32 %v287, 4294901760
        %694 = vmatmul.mubr.f32.gmra.mxu0 %v693
        %v695 = vpop.f32.mrf.mxu0
        %v696 = vadd.f32 %v613, %v695
        %v697 = vpop.f32.mrf.mxu0
        %698 = vdwg.mxu0
        %699 = vmatprep.subr.mxu0 0.0
        %700 = vmatpush1.msra.mxu0 0.0
        %701 = vmatprep.subr.mxu0 0.0
        %702 = vmatpush1.msra.mxu0 0.0
        %703 = vmatprep.subr.mxu0 0.0
        %704 = vmatpush1.msra.mxu0 0.0
        %705 = vmatprep.subr.mxu0 0.0
        %706 = vmatpush1.msra.mxu0 0.0
        %707 = vmatprep.subr.mxu0 0.0
        %708 = vmatpush1.msra.mxu0 0.0
        %709 = vmatprep.subr.mxu0 0.0
        %710 = vmatpush1.msra.mxu0 0.0
        %711 = vmatprep.subr.mxu0 0.0
        %712 = vmatpush1.msra.mxu0 0.0
        %713 = vmatprep.subr.mxu0 0.0
        %714 = vmatpush1.msra.mxu0 0.0
        %715 = vmatprep.subr.mxu0 0.0
        %716 = vmatpush1.msra.mxu0 0.0
        %717 = vmatprep.subr.mxu0 0.0
        %718 = vmatpush1.msra.mxu0 0.0
        %719 = vmatprep.subr.mxu0 0.0
        %720 = vmatpush1.msra.mxu0 0.0
        %721 = vmatprep.subr.mxu0 0.0
        %722 = vmatpush1.msra.mxu0 0.0
        %723 = vmatprep.subr.mxu0 0.0
        %v724 = vand.u32 %v284, 4294901760
        %725 = vmatpush1.msra.mxu0 %v724
        %726 = vmatprep.subr.mxu0 0.0
        %v727 = vand.u32 %v283, 4294901760
        %728 = vmatpush1.msra.mxu0 %v727
        %729 = vmatprep.subr.mxu0 0.0
        %v730 = vand.u32 %v282, 4294901760
        %731 = vmatpush1.msra.mxu0 %v730
        %732 = vmatprep.subr.mxu0 0.0
        %v733 = vand.u32 %v281, 4294901760
        %734 = vmatpush1.msra.mxu0 %v733
        %735 = vmatprep.subr.mxu0 0.0
        %736 = vmatpush2.msra.mxu0 0.0
        %737 = vmatprep.subr.mxu0 0.0
        %738 = vmatpush2.msra.mxu0 0.0
        %739 = vmatprep.subr.mxu0 0.0
        %740 = vmatpush2.msra.mxu0 0.0
        %741 = vmatprep.subr.mxu0 0.0
        %742 = vmatpush2.msra.mxu0 0.0
        %743 = vmatprep.subr.mxu0 0.0
        %744 = vmatpush2.msra.mxu0 0.0
        %745 = vmatprep.subr.mxu0 0.0
        %746 = vmatpush2.msra.mxu0 0.0
        %747 = vmatprep.subr.mxu0 0.0
        %748 = vmatpush2.msra.mxu0 0.0
        %749 = vmatprep.subr.mxu0 0.0
        %750 = vmatpush2.msra.mxu0 0.0
        %751 = vmatprep.subr.mxu0 0.0
        %752 = vmatpush2.msra.mxu0 0.0
        %753 = vmatprep.subr.mxu0 0.0
        %754 = vmatpush2.msra.mxu0 0.0
        %755 = vmatprep.subr.mxu0 0.0
        %756 = vmatpush2.msra.mxu0 0.0
        %757 = vmatprep.subr.mxu0 0.0
        %758 = vmatpush2.msra.mxu0 0.0
        %759 = vmatprep.subr.mxu0 0.0
        %760 = vmatpush2.msra.mxu0 0.0
        %761 = vmatprep.subr.mxu0 0.0
        %762 = vmatpush2.msra.mxu0 0.0
        %763 = vmatprep.subr.mxu0 0.0
        %764 = vmatpush2.msra.mxu0 0.0
        %765 = vmatprep.subr.mxu0 0.0
        %766 = vmatpush2.msra.mxu0 0.0
        %767 = vmatprep.mubr.f32.mxu0 0.0
        %v768 = vand.u32 %v287, 4294901760
        %769 = vmatmul.mubr.f32.gmra.mxu0 %v768
        %v770 = vpop.f32.mrf.mxu0
        %v771 = vadd.f32 %v696, %v770
        %v772 = vpop.f32.mrf.mxu0
        %773 = vdwg.mxu0
        %v774 = vld [vmem:[%s275] sm:$0xff]
        %v775 = vld [vmem:[%s3] sm:$0x1]
        %777 = vset.pattern.permute.xlu0 0
        %778 = vperm.xlu0 %777, %v774
        %v779 = vpop.permute.xlu0 %778
        %v782 = vlaneseq
        %v783 = vshrl.u32 %v782, 7
        %v784 = vsub.s32 0, %v783
        %v785 = vrot.slane %v775, %v784
        %v787 = vadd.f32 %v779, %v785
        %v788 = vmul.f32 %v771, 2.0
        %v789 = vsub.f32 %v787, %v788
        %v790 = vld [vmem:[%s279] sm:$0xff]
        %v791 = vld [vmem:[%s5] sm:$0x1]
        %792 = vset.pattern.permute.xlu0 0
        %793 = vperm.xlu0 %792, %v790
        %v794 = vpop.permute.xlu0 %793
        %v795 = vlaneseq
        %v796 = vshrl.u32 %v795, 7
        %v797 = vsub.s32 0, %v796
        %v798 = vrot.slane %v791, %v797
        %vm799 = vcmp.eq.s32.totalorder %v794, %v798
        %v800 = vlaneseq
        %v801 = vshrl.u32 %v800, 7
        %s802 = smul.u32 %s20, 8
        %v803 = vstv %s802
        %v804 = vadd.s32 %v801, %v803
        %v805 = vlaneseq
        %v806 = vand.u32 %v805, 127
        %vm807 = vcmp.ne.s32.totalorder %v804, %v806
        %vm808 = vmand %vm799, %vm807
        %vm809 = vmxor %vm799, 1
        %v810 = vsel %vm808, %v789, 1e+30
        %vm811 = vcmask 130048
        %v812 = vsel %vm811, %v810, inf
        %813 = vmin.xlane.f32.xlu0 %v812
        %v814 = vpop.xlane.xlu0 %813
        %v815 = vsel %vm809, %v789, 1e+30
        %v816 = vsel %vm811, %v815, inf
        %817 = vmin.xlane.f32.xlu0 %v816
        %v818 = vpop.xlane.xlu0 %817
        %v819 = vmax.f32 %v814, 0.0
        %v820 = vrsqrt.pop %v819
        %v821 = vmul.f32 %v819, %v820
        %vm822 = vcmp.eq.f32.partialorder %v819, inf
        %v823 = vsel %vm822, %v819, %v821
        %vm824 = vcmp.eq.f32.partialorder %v819, 0.0
        %v825 = vand.u32 %v819, 2147483648
        %v826 = vsel %vm824, %v825, %v823
        %v827 = vmax.f32 %v818, 0.0
        %v828 = vrsqrt.pop %v827
        %v829 = vmul.f32 %v827, %v828
        %vm830 = vcmp.eq.f32.partialorder %v827, inf
        %v831 = vsel %vm830, %v827, %v829
        %vm832 = vcmp.eq.f32.partialorder %v827, 0.0
        %v833 = vand.u32 %v827, 2147483648
        %v834 = vsel %vm832, %v833, %v831
        %v835 = vsel %vm799, 1, 0
        %v836 = vsel %vm811, %v835, 0
        %v837 = vand.u32 %v836, 65535
        %v838 = vshrl.u32 %v836, 16
        %v839 = vcvt.s32.f32 %v837
        %v840 = vcvt.s32.f32 %v838
        %841 = vadd.xlane.f32.xlu0 %v839
        %v842 = vpop.xlane.xlu0 %841
        %843 = vadd.xlane.f32.xlu0 %v840
        %v844 = vpop.xlane.xlu0 %843
        %v845 = vcvt.f32.s32 %v842
        %v846 = vcvt.f32.s32 %v844
        %v847 = vshll.u32 %v846, 16
        %v848 = vadd.s32 %v847, %v845
        %v849 = vsub.s32 %v848, 1
        %v850 = vsub.s32 16, %v848
        %vm851 = vcmp.gt.s32.totalorder %v849, 1
        %vm852 = vcmp.gt.s32.totalorder %v850, 0
        %vm853 = vmand %vm851, %vm852
        %v854 = vsel %vm853, 1, 0
        %v855 = vcvt.s32.f32 %v854
        %v856 = vsub.f32 %v826, %v834
        %v857 = vmul.f32 %v856, 2.5
        %v858 = vmax.f32 %v857, 0.0
        %v859 = vand.u32 2147483647, %v857
        %v860 = vsub.f32 0.0, %v859
        %v861 = vmul.f32 %v860, 1.442695
        %v862 = vpow.pop %v861
        %v863 = vadd.f32 %v862, 1.0
        %v864 = vlog2.pop %v863
        %v865 = vmul.f32 %v864, 0.6931472
        %v866 = vadd.f32 %v858, %v865
        %v867 = vmul.f32 %v866, %v855
        %vm868 = vcmask 7168
        %v869 = vsel %vm868, %v867, 0.0
        %870 = vadd.xlane.f32.xlu0 %v869
        %v871 = vpop.xlane.xlu0 %870
        %v872 = vrot.slane %v871, 4
        %v873 = vadd.f32 %v871, %v872
        %v874 = vrot.slane %v873, 2
        %v875 = vadd.f32 %v873, %v874
        %v876 = vrot.slane %v875, 1
        %v877 = vadd.f32 %v875, %v876
        %s878 = vtos %v877
        %v879 = vsel %vm868, %v855, 0.0
        %880 = vadd.xlane.f32.xlu0 %v879
        %v881 = vpop.xlane.xlu0 %880
        %v882 = vrot.slane %v881, 4
        %v883 = vadd.f32 %v881, %v882
        %v884 = vrot.slane %v883, 2
        %v885 = vadd.f32 %v883, %v884
        %v886 = vrot.slane %v885, 1
        %v887 = vadd.f32 %v885, %v886
        %s888 = vtos %v887
        %vm889 = vcmp.eq.s32.totalorder %v806, 0
        %v890 = vstv %s878
        %v891 = vstv %s888
        %v892 = vsel %vm889, %v890, %v891
        %vm893 = vcmask 8192
        %894 = vst.msk [vmem:[%s267] sm:$0x1] %vm893, %v892
        %s895 = sand.u32 %s169, 1
        %s896 = scalar_lea.sflag [#allocation3], %s895
        %s897 = sand.u32 %s169, 1
        %s898 = scalar_lea.vmem [#allocation2], %s897
        // Predicated region
        $region45: #{tpu_custom_call.1} parent=43 // pred_check
          %p899 = pneg %p179
        $region46: #{tpu_custom_call.1} parent=43 // pred_check_branch
          %901 = sbr.rel (%p899) target = $region48
        $region47: #{tpu_custom_call.1} parent=43 // pred_region
          %s903 = ssub.s32 16, 16
          %904 = vsyncadd %s896, %s903
          %s905 = smul.addr %s20, 16
          %s906 = scalar_lea.hbm %s6, %s905
          %s908 = sshll.u32 %s898, 4
          %s909 = int_to_ptr.vmem [resolvable:$true] %s908
          %911 = dma.vmem_to_hbm [thread:$0]  %s909, 16, %s906, %s896
        $region48: #{tpu_custom_call.1} parent=43 // pred_fallthru
          _
      $region44: #{tpu_custom_call.1} parent=5 // pred_fallthru
        _
      %p912 = scmp.le.s32.totalorder 2, %s15
      // Predicated region
      $region49: #{tpu_custom_call.1} parent=5 // pred_check
        %p913 = pneg %p912
      $region50: #{tpu_custom_call.1} parent=5 // pred_check_branch
        %915 = sbr.rel (%p913) target = $region52
      $region51: #{tpu_custom_call.1} parent=5 // pred_region
        %s916 = ssub.s32 %s15, 2
        // Predicated region
        $region53: #{tpu_custom_call.1} parent=51 // pred_check
          %p917 = pneg %p185
        $region54: #{tpu_custom_call.1} parent=51 // pred_check_branch
          %919 = sbr.rel (%p917) target = $region56
        $region55: #{tpu_custom_call.1} parent=51 // pred_region
          %s920 = sand.u32 %s170, 1
          %s921 = scalar_lea.sflag [#allocation3], %s920
          %s922 = sand.u32 %s170, 1
          %s923 = scalar_lea.vmem [#allocation2], %s922
          %924 = dma.done %s921, 16
        $region56: #{tpu_custom_call.1} parent=51 // pred_fallthru
          _
      $region52: #{tpu_custom_call.1} parent=5 // pred_fallthru
        _
    $region6: #{tpu_custom_call.1} parent=1 // loop_footer
      %s19 = sadd.s32 1, %s15
    $region7: #{tpu_custom_call.1} parent=1 // loop_footer_branch
      %14 = sbr.rel target = $region3
    $region8: #{tpu_custom_call.1} parent=1 // loop_exit
      _
    %925 = vsyncpa [#allocation3], 1
    %s926 = scalar_lea.sflag [#allocation3], 1
    %927 = vsyncpa %s926, 1

// kernel: tpu_custom_call.1
$region0: #{tpu_custom_call.1}
  #allocation0 [shape = 'u32[]', space=smem, size = 0x4, offset = 0x4, fixed_abs, tag = 'smem constant byte address 0x4 - core index']
  #allocation1 [shape = 'u32[144,128]{1,0:T(1,128)}', space=vmem, size = 0x12000, scoped, tag = 'internal scratch']
  %s0 = inlined_call_operand.vmem [shape: f32[16,32], index: 0, kind: input, shape index: {}]
  %s1 = inlined_call_operand.vmem [shape: f32[32,16], index: 1, kind: input, shape index: {}]
  %s2 = inlined_call_operand.vmem [shape: f32[16,1], index: 2, kind: input, shape index: {}]
  %s3 = inlined_call_operand.vmem [shape: f32[1,16], index: 3, kind: input, shape index: {}]
  %s4 = inlined_call_operand.vmem [shape: s32[16,1], index: 4, kind: input, shape index: {}]
  %s5 = inlined_call_operand.vmem [shape: s32[1,16], index: 5, kind: input, shape index: {}]
  %s6 = inlined_call_operand.hbm [shape: f32[2,1,2], index: 6, kind: output, shape index: {}]
  %s7 = sld [smem:[#allocation0]]
  $region57: #{tpu_custom_call.1} parent=0
    _
  %s9 = ssub.s32 1, %s7
  %s10 = scalar_select 0, %s9, %s7
  $region1: #{tpu_custom_call.1} parent=0
    #allocation2 [shape = 'u8[1024]{0}', space=vmem, size = 0x400, scoped, tag = 'output window, operand 0']
    #allocation3 [shape = 's32[2]{0}', space=sflag, size = 0x8, scoped, tag = 'scoped memory for tpu_custom_call.1']
    %11 = vsyncpa [#allocation3], 0
    %s12 = scalar_lea.sflag [#allocation3], 1
    %13 = vsyncpa %s12, 0
    loop: start=0, step=1, limit=4
    $region2: #{tpu_custom_call.1} parent=1 // loop_pre_header
      _
    $region3: #{tpu_custom_call.1} parent=1 // loop_header
      %s15 = sphi 0, %s19
      %p16 = scmp.ge.s32.totalorder %s15, 4
      %s25 = sphi 0, %s27
      %s28 = sphi 0, %s25
      %s29 = sphi 0, %s28
      %s45 = sphi 0, %s29
      %s49 = sphi 0, %s49
      %s51 = sphi 0, %s49
      %s52 = sphi 0, %s51
      %s66 = sphi 0, %s52
      %s72 = sphi 0, %s74
      %s75 = sphi 0, %s72
      %s76 = sphi 0, %s75
      %s92 = sphi 0, %s76
      %s96 = sphi 0, %s96
      %s98 = sphi 0, %s96
      %s99 = sphi 0, %s98
      %s113 = sphi 0, %s99
      %s119 = sphi 0, %s121
      %s122 = sphi 0, %s119
      %s123 = sphi 0, %s122
      %s139 = sphi 0, %s123
      %s143 = sphi 0, %s143
      %s145 = sphi 0, %s143
      %s146 = sphi 0, %s145
      %s160 = sphi 0, %s146
      %s166 = sphi 0, %s168
      %s169 = sphi 0, %s166
      %s170 = sphi 0, %s169
      %s186 = sphi 0, %s170
    $region4: #{tpu_custom_call.1} parent=1 // loop_header_branch
      %18 = sbr.rel (%p16) target = $region8
    $region5: #{tpu_custom_call.1} parent=1 // loop_body
      %s20 = ssub.s32 %s15, 1
      %s21 = ssub.s32 %s15, 2
      %s22 = sadd.s32 %s15, 1
      %s23 = ssub.s32 %s15, %s22
      %p24 = scmp.eq.s32.totalorder %s23, 0
      %s26 = sadd.s32 %s25, 1
      %s27 = scalar_select %p24, %s25, %s26
      %p30 = pneg %p24
      %p31 = scmp.eq.s32.totalorder %s15, 1
      %p32 = por %p30, %p31
      %p33 = scmp.ne.s32.totalorder %s25, %s28
      %p34 = scmp.eq.s32.totalorder %s15, 0
      %p35 = por %p33, %p34
      %p36 = scmp.ne.s32.totalorder %s25, %s28
      %p37 = scmp.eq.s32.totalorder %s20, 1
      %p38 = por %p36, %p37
      %p39 = scmp.ne.s32.totalorder %s28, %s29
      %p40 = scmp.eq.s32.totalorder %s20, 0
      %p41 = por %p39, %p40
      %p42 = scmp.ne.s32.totalorder %s28, %s29
      %p43 = scmp.eq.s32.totalorder %s21, 1
      %p44 = por %p42, %p43
      %p46 = scmp.ne.s32.totalorder %s29, %s45
      %p47 = scmp.eq.s32.totalorder %s21, 0
      %p48 = por %p46, %p47
      %s50 = sadd.s32 %s49, 1
      %p53 = scmp.eq.s32.totalorder %s15, 1
      %p54 = scmp.ne.s32.totalorder %s49, %s51
      %p55 = scmp.eq.s32.totalorder %s15, 0
      %p56 = por %p54, %p55
      %p57 = scmp.ne.s32.totalorder %s49, %s51
      %p58 = scmp.eq.s32.totalorder %s20, 1
      %p59 = por %p57, %p58
      %p60 = scmp.ne.s32.totalorder %s51, %s52
      %p61 = scmp.eq.s32.totalorder %s20, 0
      %p62 = por %p60, %p61
      %p63 = scmp.ne.s32.totalorder %s51, %s52
      %p64 = scmp.eq.s32.totalorder %s21, 1
      %p65 = por %p63, %p64
      %p67 = scmp.ne.s32.totalorder %s52, %s66
      %p68 = scmp.eq.s32.totalorder %s21, 0
      %p69 = por %p67, %p68
      %s70 = ssub.s32 %s15, %s22
      %p71 = scmp.eq.s32.totalorder %s70, 0
      %s73 = sadd.s32 %s72, 1
      %s74 = scalar_select %p71, %s72, %s73
      %p77 = pneg %p71
      %p78 = scmp.eq.s32.totalorder %s15, 1
      %p79 = por %p77, %p78
      %p80 = scmp.ne.s32.totalorder %s72, %s75
      %p81 = scmp.eq.s32.totalorder %s15, 0
      %p82 = por %p80, %p81
      %p83 = scmp.ne.s32.totalorder %s72, %s75
      %p84 = scmp.eq.s32.totalorder %s20, 1
      %p85 = por %p83, %p84
      %p86 = scmp.ne.s32.totalorder %s75, %s76
      %p87 = scmp.eq.s32.totalorder %s20, 0
      %p88 = por %p86, %p87
      %p89 = scmp.ne.s32.totalorder %s75, %s76
      %p90 = scmp.eq.s32.totalorder %s21, 1
      %p91 = por %p89, %p90
      %p93 = scmp.ne.s32.totalorder %s76, %s92
      %p94 = scmp.eq.s32.totalorder %s21, 0
      %p95 = por %p93, %p94
      %s97 = sadd.s32 %s96, 1
      %p100 = scmp.eq.s32.totalorder %s15, 1
      %p101 = scmp.ne.s32.totalorder %s96, %s98
      %p102 = scmp.eq.s32.totalorder %s15, 0
      %p103 = por %p101, %p102
      %p104 = scmp.ne.s32.totalorder %s96, %s98
      %p105 = scmp.eq.s32.totalorder %s20, 1
      %p106 = por %p104, %p105
      %p107 = scmp.ne.s32.totalorder %s98, %s99
      %p108 = scmp.eq.s32.totalorder %s20, 0
      %p109 = por %p107, %p108
      %p110 = scmp.ne.s32.totalorder %s98, %s99
      %p111 = scmp.eq.s32.totalorder %s21, 1
      %p112 = por %p110, %p111
      %p114 = scmp.ne.s32.totalorder %s99, %s113
      %p115 = scmp.eq.s32.totalorder %s21, 0
      %p116 = por %p114, %p115
      %s117 = ssub.s32 %s15, %s22
      %p118 = scmp.eq.s32.totalorder %s117, 0
      %s120 = sadd.s32 %s119, 1
      %s121 = scalar_select %p118, %s119, %s120
      %p124 = pneg %p118
      %p125 = scmp.eq.s32.totalorder %s15, 1
      %p126 = por %p124, %p125
      %p127 = scmp.ne.s32.totalorder %s119, %s122
      %p128 = scmp.eq.s32.totalorder %s15, 0
      %p129 = por %p127, %p128
      %p130 = scmp.ne.s32.totalorder %s119, %s122
      %p131 = scmp.eq.s32.totalorder %s20, 1
      %p132 = por %p130, %p131
      %p133 = scmp.ne.s32.totalorder %s122, %s123
      %p134 = scmp.eq.s32.totalorder %s20, 0
      %p135 = por %p133, %p134
      %p136 = scmp.ne.s32.totalorder %s122, %s123
      %p137 = scmp.eq.s32.totalorder %s21, 1
      %p138 = por %p136, %p137
      %p140 = scmp.ne.s32.totalorder %s123, %s139
      %p141 = scmp.eq.s32.totalorder %s21, 0
      %p142 = por %p140, %p141
      %s144 = sadd.s32 %s143, 1
      %p147 = scmp.eq.s32.totalorder %s15, 1
      %p148 = scmp.ne.s32.totalorder %s143, %s145
      %p149 = scmp.eq.s32.totalorder %s15, 0
      %p150 = por %p148, %p149
      %p151 = scmp.ne.s32.totalorder %s143, %s145
      %p152 = scmp.eq.s32.totalorder %s20, 1
      %p153 = por %p151, %p152
      %p154 = scmp.ne.s32.totalorder %s145, %s146
      %p155 = scmp.eq.s32.totalorder %s20, 0
      %p156 = por %p154, %p155
      %p157 = scmp.ne.s32.totalorder %s145, %s146
      %p158 = scmp.eq.s32.totalorder %s21, 1
      %p159 = por %p157, %p158
      %p161 = scmp.ne.s32.totalorder %s146, %s160
      %p162 = scmp.eq.s32.totalorder %s21, 0
      %p163 = por %p161, %p162
      %s164 = ssub.s32 %s15, %s22
      %p165 = scmp.eq.s32.totalorder %s164, 0
      %s167 = sadd.s32 %s166, 1
      %s168 = scalar_select %p165, %s166, %s167
      %p171 = pneg %p165
      %p172 = scmp.eq.s32.totalorder %s15, 1
      %p173 = por %p171, %p172
      %p174 = scmp.ne.s32.totalorder %s166, %s169
      %p175 = scmp.eq.s32.totalorder %s15, 0
      %p176 = por %p174, %p175
      %p177 = scmp.ne.s32.totalorder %s166, %s169
      %p178 = scmp.eq.s32.totalorder %s20, 1
      %p179 = por %p177, %p178
      %p180 = scmp.ne.s32.totalorder %s169, %s170
      %p181 = scmp.eq.s32.totalorder %s20, 0
      %p182 = por %p180, %p181
      %p183 = scmp.ne.s32.totalorder %s169, %s170
      %p184 = scmp.eq.s32.totalorder %s21, 1
      %p185 = por %p183, %p184
      %p187 = scmp.ne.s32.totalorder %s170, %s186
      %p188 = scmp.eq.s32.totalorder %s21, 0
      %p189 = por %p187, %p188
      %p190 = scmp.le.s32.totalorder 1, %s15
      %p191 = scmp.lt.s32.totalorder %s15, 3
      %p192 = pnand %p190, %p191
      %p193 = pneg %p192
      // Predicated region
      $region9: #{tpu_custom_call.1} parent=5 // pred_check
        _
      $region10: #{tpu_custom_call.1} parent=5 // pred_check_branch
        %195 = sbr.rel (%p192) target = $region12
      $region11: #{tpu_custom_call.1} parent=5 // pred_region
        %s196 = ssub.s32 %s15, 1
        // Predicated region
        $region13: #{tpu_custom_call.1} parent=11 // pred_check
          %p197 = pneg %p62
        $region14: #{tpu_custom_call.1} parent=11 // pred_check_branch
          %199 = sbr.rel (%p197) target = $region16
        $region15: #{tpu_custom_call.1} parent=11 // pred_region
          _
        $region16: #{tpu_custom_call.1} parent=11 // pred_fallthru
          _
        // Predicated region
        $region17: #{tpu_custom_call.1} parent=11 // pred_check
          %p200 = pneg %p109
        $region18: #{tpu_custom_call.1} parent=11 // pred_check_branch
          %202 = sbr.rel (%p200) target = $region20
        $region19: #{tpu_custom_call.1} parent=11 // pred_region
          _
        $region20: #{tpu_custom_call.1} parent=11 // pred_fallthru
          _
        // Predicated region
        $region21: #{tpu_custom_call.1} parent=11 // pred_check
          %p203 = pneg %p156
        $region22: #{tpu_custom_call.1} parent=11 // pred_check_branch
          %205 = sbr.rel (%p203) target = $region24
        $region23: #{tpu_custom_call.1} parent=11 // pred_region
          _
        $region24: #{tpu_custom_call.1} parent=11 // pred_fallthru
          _
      $region12: #{tpu_custom_call.1} parent=5 // pred_fallthru
        _
      %p206 = scmp.lt.s32.totalorder %s15, 2
      // Predicated region
      $region25: #{tpu_custom_call.1} parent=5 // pred_check
        %p207 = pneg %p206
      $region26: #{tpu_custom_call.1} parent=5 // pred_check_branch
        %209 = sbr.rel (%p207) target = $region28
      $region27: #{tpu_custom_call.1} parent=5 // pred_region
        // Predicated region
        $region29: #{tpu_custom_call.1} parent=27 // pred_check
          %p210 = pneg %p35
        $region30: #{tpu_custom_call.1} parent=27 // pred_check_branch
          %212 = sbr.rel (%p210) target = $region32
        $region31: #{tpu_custom_call.1} parent=27 // pred_region
          %p213 = scmp.lt.s32.totalorder %s15, 1
          %s214 = scalar_select %p213, %s15, 1
          %s215 = smul.addr %s214, 8
          %s216 = scalar_lea.vmem %s0, %s215
        $region32: #{tpu_custom_call.1} parent=27 // pred_fallthru
          _
        // Predicated region
        $region33: #{tpu_custom_call.1} parent=27 // pred_check
          %p217 = pneg %p82
        $region34: #{tpu_custom_call.1} parent=27 // pred_check_branch
          %219 = sbr.rel (%p217) target = $region36
        $region35: #{tpu_custom_call.1} parent=27 // pred_region
          %p220 = scmp.lt.s32.totalorder %s15, 1
          %s221 = scalar_select %p220, %s15, 1
          %s222 = smul.addr %s221, 8
          %s223 = scalar_lea.vmem %s2, %s222
        $region36: #{tpu_custom_call.1} parent=27 // pred_fallthru
          _
        // Predicated region
        $region37: #{tpu_custom_call.1} parent=27 // pred_check
          %p224 = pneg %p129
        $region38: #{tpu_custom_call.1} parent=27 // pred_check_branch
          %226 = sbr.rel (%p224) target = $region40
        $region39: #{tpu_custom_call.1} parent=27 // pred_region
          %p227 = scmp.lt.s32.totalorder %s15, 1
          %s228 = scalar_select %p227, %s15, 1
          %s229 = smul.addr %s228, 8
          %s230 = scalar_lea.vmem %s4, %s229
        $region40: #{tpu_custom_call.1} parent=27 // pred_fallthru
          _
      $region28: #{tpu_custom_call.1} parent=5 // pred_fallthru
        _
      %p231 = scmp.le.s32.totalorder 1, %s15
      %p232 = scmp.lt.s32.totalorder %s15, 3
      %p233 = pnand %p231, %p232
      %p234 = pneg %p233
      // Predicated region
      $region41: #{tpu_custom_call.1} parent=5 // pred_check
        _
      $region42: #{tpu_custom_call.1} parent=5 // pred_check_branch
        %236 = sbr.rel (%p233) target = $region44
      $region43: #{tpu_custom_call.1} parent=5 // pred_region
        %s237 = ssub.s32 %s15, 1
        %p238 = scmp.lt.s32.totalorder %s20, 1
        %s239 = scalar_select %p238, %s20, 1
        %s240 = smul.addr %s239, 8
        %s241 = scalar_lea.vmem %s0, %s240
        %p242 = pneg %p41
        %p243 = pneg %p38
        %p244 = pneg %p62
        %p245 = pneg %p59
        %p246 = scmp.lt.s32.totalorder %s20, 1
        %s247 = scalar_select %p246, %s20, 1
        %s248 = smul.addr %s247, 8
        %s249 = scalar_lea.vmem %s2, %s248
        %p250 = pneg %p88
        %p251 = pneg %p85
        %p252 = pneg %p109
        %p253 = pneg %p106
        %p254 = scmp.lt.s32.totalorder %s20, 1
        %s255 = scalar_select %p254, %s20, 1
        %s256 = smul.addr %s255, 8
        %s257 = scalar_lea.vmem %s4, %s256
        %p258 = pneg %p135
        %p259 = pneg %p132
        %p260 = pneg %p156
        %p261 = pneg %p153
        %p262 = pneg %p182
        %p263 = pneg %p179
        %s264 = sand.u32 %s169, 1
        %s265 = scalar_lea.sflag [#allocation3], %s264
        %s266 = sand.u32 %s169, 1
        %s267 = scalar_lea.vmem [#allocation2], %s266
        %p268 = scmp.lt.s32.totalorder %s20, 1
        %s269 = scalar_select %p268, %s20, 1
        %s270 = smul.addr %s269, 8
        %s271 = scalar_lea.vmem %s0, %s270
        %p272 = scmp.lt.s32.totalorder %s20, 1
        %s273 = scalar_select %p272, %s20, 1
        %s274 = smul.addr %s273, 8
        %s275 = scalar_lea.vmem %s2, %s274
        %p276 = scmp.lt.s32.totalorder %s20, 1
        %s277 = scalar_select %p276, %s20, 1
        %s278 = smul.addr %s277, 8
        %s279 = scalar_lea.vmem %s4, %s278
        %v280 = vld [vmem:[%s271] sm:$0xff]
        %v281 = vld [vmem:[%s1] sm:$0xff]
        %v282 = vld [vmem:[%s1 + $0x8] sm:$0xff]
        %v283 = vld [vmem:[%s1 + $0x10] sm:$0xff]
        %v284 = vld [vmem:[%s1 + $0x18] sm:$0xff]
        %vm285 = vcmask 261120
        %v287 = vsel %vm285, %v280, 0
        %289 = vmatprep.subr.mxu0 0.0
        %290 = vmatpush1.msra.mxu0 0.0
        %291 = vmatprep.subr.mxu0 0.0
        %292 = vmatpush1.msra.mxu0 0.0
        %293 = vmatprep.subr.mxu0 0.0
        %294 = vmatpush1.msra.mxu0 0.0
        %295 = vmatprep.subr.mxu0 0.0
        %296 = vmatpush1.msra.mxu0 0.0
        %297 = vmatprep.subr.mxu0 0.0
        %298 = vmatpush1.msra.mxu0 0.0
        %299 = vmatprep.subr.mxu0 0.0
        %300 = vmatpush1.msra.mxu0 0.0
        %301 = vmatprep.subr.mxu0 0.0
        %302 = vmatpush1.msra.mxu0 0.0
        %303 = vmatprep.subr.mxu0 0.0
        %304 = vmatpush1.msra.mxu0 0.0
        %305 = vmatprep.subr.mxu0 0.0
        %306 = vmatpush1.msra.mxu0 0.0
        %307 = vmatprep.subr.mxu0 0.0
        %308 = vmatpush1.msra.mxu0 0.0
        %309 = vmatprep.subr.mxu0 0.0
        %310 = vmatpush1.msra.mxu0 0.0
        %311 = vmatprep.subr.mxu0 0.0
        %312 = vmatpush1.msra.mxu0 0.0
        %313 = vmatprep.subr.mxu0 0.0
        %v314 = vand.u32 %v284, 4294901760
        %315 = vmatpush1.msra.mxu0 %v314
        %316 = vmatprep.subr.mxu0 0.0
        %v317 = vand.u32 %v283, 4294901760
        %318 = vmatpush1.msra.mxu0 %v317
        %319 = vmatprep.subr.mxu0 0.0
        %v320 = vand.u32 %v282, 4294901760
        %321 = vmatpush1.msra.mxu0 %v320
        %322 = vmatprep.subr.mxu0 0.0
        %v323 = vand.u32 %v281, 4294901760
        %324 = vmatpush1.msra.mxu0 %v323
        %325 = vmatprep.subr.mxu0 0.0
        %326 = vmatpush2.msra.mxu0 0.0
        %327 = vmatprep.subr.mxu0 0.0
        %328 = vmatpush2.msra.mxu0 0.0
        %329 = vmatprep.subr.mxu0 0.0
        %330 = vmatpush2.msra.mxu0 0.0
        %331 = vmatprep.subr.mxu0 0.0
        %332 = vmatpush2.msra.mxu0 0.0
        %333 = vmatprep.subr.mxu0 0.0
        %334 = vmatpush2.msra.mxu0 0.0
        %335 = vmatprep.subr.mxu0 0.0
        %336 = vmatpush2.msra.mxu0 0.0
        %337 = vmatprep.subr.mxu0 0.0
        %338 = vmatpush2.msra.mxu0 0.0
        %339 = vmatprep.subr.mxu0 0.0
        %340 = vmatpush2.msra.mxu0 0.0
        %341 = vmatprep.subr.mxu0 0.0
        %342 = vmatpush2.msra.mxu0 0.0
        %343 = vmatprep.subr.mxu0 0.0
        %344 = vmatpush2.msra.mxu0 0.0
        %345 = vmatprep.subr.mxu0 0.0
        %346 = vmatpush2.msra.mxu0 0.0
        %347 = vmatprep.subr.mxu0 0.0
        %348 = vmatpush2.msra.mxu0 0.0
        %349 = vmatprep.subr.mxu0 0.0
        %350 = vmatpush2.msra.mxu0 0.0
        %351 = vmatprep.subr.mxu0 0.0
        %352 = vmatpush2.msra.mxu0 0.0
        %353 = vmatprep.subr.mxu0 0.0
        %354 = vmatpush2.msra.mxu0 0.0
        %355 = vmatprep.subr.mxu0 0.0
        %356 = vmatpush2.msra.mxu0 0.0
        %357 = vmatprep.mubr.f32.mxu0 0.0
        %v358 = vand.u32 %v287, 4294901760
        %v359 = vsub.f32 %v287, %v358
        %v360 = vand.u32 %v359, 4294901760
        %v361 = vsub.f32 %v359, %v360
        %v362 = vand.u32 %v361, 4294901760
        %363 = vmatmul.mubr.f32.gmra.mxu0 %v362
        %v364 = vpop.f32.mrf.mxu0
        %v365 = vadd.f32 0.0, %v364
        %v366 = vpop.f32.mrf.mxu0
        %367 = vdwg.mxu0
        %368 = vmatprep.subr.mxu0 0.0
        %369 = vmatpush1.msra.mxu0 0.0
        %370 = vmatprep.subr.mxu0 0.0
        %371 = vmatpush1.msra.mxu0 0.0
        %372 = vmatprep.subr.mxu0 0.0
        %373 = vmatpush1.msra.mxu0 0.0
        %374 = vmatprep.subr.mxu0 0.0
        %375 = vmatpush1.msra.mxu0 0.0
        %376 = vmatprep.subr.mxu0 0.0
        %377 = vmatpush1.msra.mxu0 0.0
        %378 = vmatprep.subr.mxu0 0.0
        %379 = vmatpush1.msra.mxu0 0.0
        %380 = vmatprep.subr.mxu0 0.0
        %381 = vmatpush1.msra.mxu0 0.0
        %382 = vmatprep.subr.mxu0 0.0
        %383 = vmatpush1.msra.mxu0 0.0
        %384 = vmatprep.subr.mxu0 0.0
        %385 = vmatpush1.msra.mxu0 0.0
        %386 = vmatprep.subr.mxu0 0.0
        %387 = vmatpush1.msra.mxu0 0.0
        %388 = vmatprep.subr.mxu0 0.0
        %389 = vmatpush1.msra.mxu0 0.0
        %390 = vmatprep.subr.mxu0 0.0
        %391 = vmatpush1.msra.mxu0 0.0
        %392 = vmatprep.subr.mxu0 0.0
        %v393 = vand.u32 %v284, 4294901760
        %v394 = vsub.f32 %v284, %v393
        %v395 = vand.u32 %v394, 4294901760
        %v396 = vsub.f32 %v394, %v395
        %v397 = vand.u32 %v396, 4294901760
        %398 = vmatpush1.msra.mxu0 %v397
        %399 = vmatprep.subr.mxu0 0.0
        %v400 = vand.u32 %v283, 4294901760
        %v401 = vsub.f32 %v283, %v400
        %v402 = vand.u32 %v401, 4294901760
        %v403 = vsub.f32 %v401, %v402
        %v404 = vand.u32 %v403, 4294901760
        %405 = vmatpush1.msra.mxu0 %v404
        %406 = vmatprep.subr.mxu0 0.0
        %v407 = vand.u32 %v282, 4294901760
        %v408 = vsub.f32 %v282, %v407
        %v409 = vand.u32 %v408, 4294901760
        %v410 = vsub.f32 %v408, %v409
        %v411 = vand.u32 %v410, 4294901760
        %412 = vmatpush1.msra.mxu0 %v411
        %413 = vmatprep.subr.mxu0 0.0
        %v414 = vand.u32 %v281, 4294901760
        %v415 = vsub.f32 %v281, %v414
        %v416 = vand.u32 %v415, 4294901760
        %v417 = vsub.f32 %v415, %v416
        %v418 = vand.u32 %v417, 4294901760
        %419 = vmatpush1.msra.mxu0 %v418
        %420 = vmatprep.subr.mxu0 0.0
        %421 = vmatpush2.msra.mxu0 0.0
        %422 = vmatprep.subr.mxu0 0.0
        %423 = vmatpush2.msra.mxu0 0.0
        %424 = vmatprep.subr.mxu0 0.0
        %425 = vmatpush2.msra.mxu0 0.0
        %426 = vmatprep.subr.mxu0 0.0
        %427 = vmatpush2.msra.mxu0 0.0
        %428 = vmatprep.subr.mxu0 0.0
        %429 = vmatpush2.msra.mxu0 0.0
        %430 = vmatprep.subr.mxu0 0.0
        %431 = vmatpush2.msra.mxu0 0.0
        %432 = vmatprep.subr.mxu0 0.0
        %433 = vmatpush2.msra.mxu0 0.0
        %434 = vmatprep.subr.mxu0 0.0
        %435 = vmatpush2.msra.mxu0 0.0
        %436 = vmatprep.subr.mxu0 0.0
        %437 = vmatpush2.msra.mxu0 0.0
        %438 = vmatprep.subr.mxu0 0.0
        %439 = vmatpush2.msra.mxu0 0.0
        %440 = vmatprep.subr.mxu0 0.0
        %441 = vmatpush2.msra.mxu0 0.0
        %442 = vmatprep.subr.mxu0 0.0
        %443 = vmatpush2.msra.mxu0 0.0
        %444 = vmatprep.subr.mxu0 0.0
        %445 = vmatpush2.msra.mxu0 0.0
        %446 = vmatprep.subr.mxu0 0.0
        %447 = vmatpush2.msra.mxu0 0.0
        %448 = vmatprep.subr.mxu0 0.0
        %449 = vmatpush2.msra.mxu0 0.0
        %450 = vmatprep.subr.mxu0 0.0
        %451 = vmatpush2.msra.mxu0 0.0
        %452 = vmatprep.mubr.f32.mxu0 0.0
        %v453 = vand.u32 %v287, 4294901760
        %454 = vmatmul.mubr.f32.gmra.mxu0 %v453
        %v455 = vpop.f32.mrf.mxu0
        %v456 = vadd.f32 %v365, %v455
        %v457 = vpop.f32.mrf.mxu0
        %458 = vdwg.mxu0
        %459 = vmatprep.subr.mxu0 0.0
        %460 = vmatpush1.msra.mxu0 0.0
        %461 = vmatprep.subr.mxu0 0.0
        %462 = vmatpush1.msra.mxu0 0.0
        %463 = vmatprep.subr.mxu0 0.0
        %464 = vmatpush1.msra.mxu0 0.0
        %465 = vmatprep.subr.mxu0 0.0
        %466 = vmatpush1.msra.mxu0 0.0
        %467 = vmatprep.subr.mxu0 0.0
        %468 = vmatpush1.msra.mxu0 0.0
        %469 = vmatprep.subr.mxu0 0.0
        %470 = vmatpush1.msra.mxu0 0.0
        %471 = vmatprep.subr.mxu0 0.0
        %472 = vmatpush1.msra.mxu0 0.0
        %473 = vmatprep.subr.mxu0 0.0
        %474 = vmatpush1.msra.mxu0 0.0
        %475 = vmatprep.subr.mxu0 0.0
        %476 = vmatpush1.msra.mxu0 0.0
        %477 = vmatprep.subr.mxu0 0.0
        %478 = vmatpush1.msra.mxu0 0.0
        %479 = vmatprep.subr.mxu0 0.0
        %480 = vmatpush1.msra.mxu0 0.0
        %481 = vmatprep.subr.mxu0 0.0
        %482 = vmatpush1.msra.mxu0 0.0
        %483 = vmatprep.subr.mxu0 0.0
        %v484 = vand.u32 %v284, 4294901760
        %v485 = vsub.f32 %v284, %v484
        %486 = vmatpush1.msra.mxu0 %v485
        %487 = vmatprep.subr.mxu0 0.0
        %v488 = vand.u32 %v283, 4294901760
        %v489 = vsub.f32 %v283, %v488
        %490 = vmatpush1.msra.mxu0 %v489
        %491 = vmatprep.subr.mxu0 0.0
        %v492 = vand.u32 %v282, 4294901760
        %v493 = vsub.f32 %v282, %v492
        %494 = vmatpush1.msra.mxu0 %v493
        %495 = vmatprep.subr.mxu0 0.0
        %v496 = vand.u32 %v281, 4294901760
        %v497 = vsub.f32 %v281, %v496
        %498 = vmatpush1.msra.mxu0 %v497
        %499 = vmatprep.subr.mxu0 0.0
        %500 = vmatpush2.msra.mxu0 0.0
        %501 = vmatprep.subr.mxu0 0.0
        %502 = vmatpush2.msra.mxu0 0.0
        %503 = vmatprep.subr.mxu0 0.0
        %504 = vmatpush2.msra.mxu0 0.0
        %505 = vmatprep.subr.mxu0 0.0
        %506 = vmatpush2.msra.mxu0 0.0
        %507 = vmatprep.subr.mxu0 0.0
        %508 = vmatpush2.msra.mxu0 0.0
        %509 = vmatprep.subr.mxu0 0.0
        %510 = vmatpush2.msra.mxu0 0.0
        %511 = vmatprep.subr.mxu0 0.0
        %512 = vmatpush2.msra.mxu0 0.0
        %513 = vmatprep.subr.mxu0 0.0
        %514 = vmatpush2.msra.mxu0 0.0
        %515 = vmatprep.subr.mxu0 0.0
        %516 = vmatpush2.msra.mxu0 0.0
        %517 = vmatprep.subr.mxu0 0.0
        %518 = vmatpush2.msra.mxu0 0.0
        %519 = vmatprep.subr.mxu0 0.0
        %520 = vmatpush2.msra.mxu0 0.0
        %521 = vmatprep.subr.mxu0 0.0
        %522 = vmatpush2.msra.mxu0 0.0
        %523 = vmatprep.subr.mxu0 0.0
        %524 = vmatpush2.msra.mxu0 0.0
        %525 = vmatprep.subr.mxu0 0.0
        %526 = vmatpush2.msra.mxu0 0.0
        %527 = vmatprep.subr.mxu0 0.0
        %528 = vmatpush2.msra.mxu0 0.0
        %529 = vmatprep.subr.mxu0 0.0
        %530 = vmatpush2.msra.mxu0 0.0
        %531 = vmatprep.mubr.f32.mxu0 0.0
        %v532 = vand.u32 %v287, 4294901760
        %v533 = vsub.f32 %v287, %v532
        %534 = vmatmul.mubr.f32.gmra.mxu0 %v533
        %v535 = vpop.f32.mrf.mxu0
        %v536 = vadd.f32 %v456, %v535
        %v537 = vpop.f32.mrf.mxu0
        %538 = vdwg.mxu0
        %539 = vmatprep.subr.mxu0 0.0
        %540 = vmatpush1.msra.mxu0 0.0
        %541 = vmatprep.subr.mxu0 0.0
        %542 = vmatpush1.msra.mxu0 0.0
        %543 = vmatprep.subr.mxu0 0.0
        %544 = vmatpush1.msra.mxu0 0.0
        %545 = vmatprep.subr.mxu0 0.0
        %546 = vmatpush1.msra.mxu0 0.0
        %547 = vmatprep.subr.mxu0 0.0
        %548 = vmatpush1.msra.mxu0 0.0
        %549 = vmatprep.subr.mxu0 0.0
        %550 = vmatpush1.msra.mxu0 0.0
        %551 = vmatprep.subr.mxu0 0.0
        %552 = vmatpush1.msra.mxu0 0.0
        %553 = vmatprep.subr.mxu0 0.0
        %554 = vmatpush1.msra.mxu0 0.0
        %555 = vmatprep.subr.mxu0 0.0
        %556 = vmatpush1.msra.mxu0 0.0
        %557 = vmatprep.subr.mxu0 0.0
        %558 = vmatpush1.msra.mxu0 0.0
        %559 = vmatprep.subr.mxu0 0.0
        %560 = vmatpush1.msra.mxu0 0.0
        %561 = vmatprep.subr.mxu0 0.0
        %562 = vmatpush1.msra.mxu0 0.0
        %563 = vmatprep.subr.mxu0 0.0
        %v564 = vand.u32 %v284, 4294901760
        %565 = vmatpush1.msra.mxu0 %v564
        %566 = vmatprep.subr.mxu0 0.0
        %v567 = vand.u32 %v283, 4294901760
        %568 = vmatpush1.msra.mxu0 %v567
        %569 = vmatprep.subr.mxu0 0.0
        %v570 = vand.u32 %v282, 4294901760
        %571 = vmatpush1.msra.mxu0 %v570
        %572 = vmatprep.subr.mxu0 0.0
        %v573 = vand.u32 %v281, 4294901760
        %574 = vmatpush1.msra.mxu0 %v573
        %575 = vmatprep.subr.mxu0 0.0
        %576 = vmatpush2.msra.mxu0 0.0
        %577 = vmatprep.subr.mxu0 0.0
        %578 = vmatpush2.msra.mxu0 0.0
        %579 = vmatprep.subr.mxu0 0.0
        %580 = vmatpush2.msra.mxu0 0.0
        %581 = vmatprep.subr.mxu0 0.0
        %582 = vmatpush2.msra.mxu0 0.0
        %583 = vmatprep.subr.mxu0 0.0
        %584 = vmatpush2.msra.mxu0 0.0
        %585 = vmatprep.subr.mxu0 0.0
        %586 = vmatpush2.msra.mxu0 0.0
        %587 = vmatprep.subr.mxu0 0.0
        %588 = vmatpush2.msra.mxu0 0.0
        %589 = vmatprep.subr.mxu0 0.0
        %590 = vmatpush2.msra.mxu0 0.0
        %591 = vmatprep.subr.mxu0 0.0
        %592 = vmatpush2.msra.mxu0 0.0
        %593 = vmatprep.subr.mxu0 0.0
        %594 = vmatpush2.msra.mxu0 0.0
        %595 = vmatprep.subr.mxu0 0.0
        %596 = vmatpush2.msra.mxu0 0.0
        %597 = vmatprep.subr.mxu0 0.0
        %598 = vmatpush2.msra.mxu0 0.0
        %599 = vmatprep.subr.mxu0 0.0
        %600 = vmatpush2.msra.mxu0 0.0
        %601 = vmatprep.subr.mxu0 0.0
        %602 = vmatpush2.msra.mxu0 0.0
        %603 = vmatprep.subr.mxu0 0.0
        %604 = vmatpush2.msra.mxu0 0.0
        %605 = vmatprep.subr.mxu0 0.0
        %606 = vmatpush2.msra.mxu0 0.0
        %607 = vmatprep.mubr.f32.mxu0 0.0
        %v608 = vand.u32 %v287, 4294901760
        %v609 = vsub.f32 %v287, %v608
        %v610 = vand.u32 %v609, 4294901760
        %611 = vmatmul.mubr.f32.gmra.mxu0 %v610
        %v612 = vpop.f32.mrf.mxu0
        %v613 = vadd.f32 %v536, %v612
        %v614 = vpop.f32.mrf.mxu0
        %615 = vdwg.mxu0
        %616 = vmatprep.subr.mxu0 0.0
        %617 = vmatpush1.msra.mxu0 0.0
        %618 = vmatprep.subr.mxu0 0.0
        %619 = vmatpush1.msra.mxu0 0.0
        %620 = vmatprep.subr.mxu0 0.0
        %621 = vmatpush1.msra.mxu0 0.0
        %622 = vmatprep.subr.mxu0 0.0
        %623 = vmatpush1.msra.mxu0 0.0
        %624 = vmatprep.subr.mxu0 0.0
        %625 = vmatpush1.msra.mxu0 0.0
        %626 = vmatprep.subr.mxu0 0.0
        %627 = vmatpush1.msra.mxu0 0.0
        %628 = vmatprep.subr.mxu0 0.0
        %629 = vmatpush1.msra.mxu0 0.0
        %630 = vmatprep.subr.mxu0 0.0
        %631 = vmatpush1.msra.mxu0 0.0
        %632 = vmatprep.subr.mxu0 0.0
        %633 = vmatpush1.msra.mxu0 0.0
        %634 = vmatprep.subr.mxu0 0.0
        %635 = vmatpush1.msra.mxu0 0.0
        %636 = vmatprep.subr.mxu0 0.0
        %637 = vmatpush1.msra.mxu0 0.0
        %638 = vmatprep.subr.mxu0 0.0
        %639 = vmatpush1.msra.mxu0 0.0
        %640 = vmatprep.subr.mxu0 0.0
        %v641 = vand.u32 %v284, 4294901760
        %v642 = vsub.f32 %v284, %v641
        %v643 = vand.u32 %v642, 4294901760
        %644 = vmatpush1.msra.mxu0 %v643
        %645 = vmatprep.subr.mxu0 0.0
        %v646 = vand.u32 %v283, 4294901760
        %v647 = vsub.f32 %v283, %v646
        %v648 = vand.u32 %v647, 4294901760
        %649 = vmatpush1.msra.mxu0 %v648
        %650 = vmatprep.subr.mxu0 0.0
        %v651 = vand.u32 %v282, 4294901760
        %v652 = vsub.f32 %v282, %v651
        %v653 = vand.u32 %v652, 4294901760
        %654 = vmatpush1.msra.mxu0 %v653
        %655 = vmatprep.subr.mxu0 0.0
        %v656 = vand.u32 %v281, 4294901760
        %v657 = vsub.f32 %v281, %v656
        %v658 = vand.u32 %v657, 4294901760
        %659 = vmatpush1.msra.mxu0 %v658
        %660 = vmatprep.subr.mxu0 0.0
        %661 = vmatpush2.msra.mxu0 0.0
        %662 = vmatprep.subr.mxu0 0.0
        %663 = vmatpush2.msra.mxu0 0.0
        %664 = vmatprep.subr.mxu0 0.0
        %665 = vmatpush2.msra.mxu0 0.0
        %666 = vmatprep.subr.mxu0 0.0
        %667 = vmatpush2.msra.mxu0 0.0
        %668 = vmatprep.subr.mxu0 0.0
        %669 = vmatpush2.msra.mxu0 0.0
        %670 = vmatprep.subr.mxu0 0.0
        %671 = vmatpush2.msra.mxu0 0.0
        %672 = vmatprep.subr.mxu0 0.0
        %673 = vmatpush2.msra.mxu0 0.0
        %674 = vmatprep.subr.mxu0 0.0
        %675 = vmatpush2.msra.mxu0 0.0
        %676 = vmatprep.subr.mxu0 0.0
        %677 = vmatpush2.msra.mxu0 0.0
        %678 = vmatprep.subr.mxu0 0.0
        %679 = vmatpush2.msra.mxu0 0.0
        %680 = vmatprep.subr.mxu0 0.0
        %681 = vmatpush2.msra.mxu0 0.0
        %682 = vmatprep.subr.mxu0 0.0
        %683 = vmatpush2.msra.mxu0 0.0
        %684 = vmatprep.subr.mxu0 0.0
        %685 = vmatpush2.msra.mxu0 0.0
        %686 = vmatprep.subr.mxu0 0.0
        %687 = vmatpush2.msra.mxu0 0.0
        %688 = vmatprep.subr.mxu0 0.0
        %689 = vmatpush2.msra.mxu0 0.0
        %690 = vmatprep.subr.mxu0 0.0
        %691 = vmatpush2.msra.mxu0 0.0
        %692 = vmatprep.mubr.f32.mxu0 0.0
        %v693 = vand.u32 %v287, 4294901760
        %694 = vmatmul.mubr.f32.gmra.mxu0 %v693
        %v695 = vpop.f32.mrf.mxu0
        %v696 = vadd.f32 %v613, %v695
        %v697 = vpop.f32.mrf.mxu0
        %698 = vdwg.mxu0
        %699 = vmatprep.subr.mxu0 0.0
        %700 = vmatpush1.msra.mxu0 0.0
        %701 = vmatprep.subr.mxu0 0.0
        %702 = vmatpush1.msra.mxu0 0.0
        %703 = vmatprep.subr.mxu0 0.0
        %704 = vmatpush1.msra.mxu0 0.0
        %705 = vmatprep.subr.mxu0 0.0
        %706 = vmatpush1.msra.mxu0 0.0
        %707 = vmatprep.subr.mxu0 0.0
        %708 = vmatpush1.msra.mxu0 0.0
        %709 = vmatprep.subr.mxu0 0.0
        %710 = vmatpush1.msra.mxu0 0.0
        %711 = vmatprep.subr.mxu0 0.0
        %712 = vmatpush1.msra.mxu0 0.0
        %713 = vmatprep.subr.mxu0 0.0
        %714 = vmatpush1.msra.mxu0 0.0
        %715 = vmatprep.subr.mxu0 0.0
        %716 = vmatpush1.msra.mxu0 0.0
        %717 = vmatprep.subr.mxu0 0.0
        %718 = vmatpush1.msra.mxu0 0.0
        %719 = vmatprep.subr.mxu0 0.0
        %720 = vmatpush1.msra.mxu0 0.0
        %721 = vmatprep.subr.mxu0 0.0
        %722 = vmatpush1.msra.mxu0 0.0
        %723 = vmatprep.subr.mxu0 0.0
        %v724 = vand.u32 %v284, 4294901760
        %725 = vmatpush1.msra.mxu0 %v724
        %726 = vmatprep.subr.mxu0 0.0
        %v727 = vand.u32 %v283, 4294901760
        %728 = vmatpush1.msra.mxu0 %v727
        %729 = vmatprep.subr.mxu0 0.0
        %v730 = vand.u32 %v282, 4294901760
        %731 = vmatpush1.msra.mxu0 %v730
        %732 = vmatprep.subr.mxu0 0.0
        %v733 = vand.u32 %v281, 4294901760
        %734 = vmatpush1.msra.mxu0 %v733
        %735 = vmatprep.subr.mxu0 0.0
        %736 = vmatpush2.msra.mxu0 0.0
        %737 = vmatprep.subr.mxu0 0.0
        %738 = vmatpush2.msra.mxu0 0.0
        %739 = vmatprep.subr.mxu0 0.0
        %740 = vmatpush2.msra.mxu0 0.0
        %741 = vmatprep.subr.mxu0 0.0
        %742 = vmatpush2.msra.mxu0 0.0
        %743 = vmatprep.subr.mxu0 0.0
        %744 = vmatpush2.msra.mxu0 0.0
        %745 = vmatprep.subr.mxu0 0.0
        %746 = vmatpush2.msra.mxu0 0.0
        %747 = vmatprep.subr.mxu0 0.0
        %748 = vmatpush2.msra.mxu0 0.0
        %749 = vmatprep.subr.mxu0 0.0
        %750 = vmatpush2.msra.mxu0 0.0
        %751 = vmatprep.subr.mxu0 0.0
        %752 = vmatpush2.msra.mxu0 0.0
        %753 = vmatprep.subr.mxu0 0.0
        %754 = vmatpush2.msra.mxu0 0.0
        %755 = vmatprep.subr.mxu0 0.0
        %756 = vmatpush2.msra.mxu0 0.0
        %757 = vmatprep.subr.mxu0 0.0
        %758 = vmatpush2.msra.mxu0 0.0
        %759 = vmatprep.subr.mxu0 0.0
        %760 = vmatpush2.msra.mxu0 0.0
        %761 = vmatprep.subr.mxu0 0.0
        %762 = vmatpush2.msra.mxu0 0.0
        %763 = vmatprep.subr.mxu0 0.0
        %764 = vmatpush2.msra.mxu0 0.0
        %765 = vmatprep.subr.mxu0 0.0
        %766 = vmatpush2.msra.mxu0 0.0
        %767 = vmatprep.mubr.f32.mxu0 0.0
        %v768 = vand.u32 %v287, 4294901760
        %769 = vmatmul.mubr.f32.gmra.mxu0 %v768
        %v770 = vpop.f32.mrf.mxu0
        %v771 = vadd.f32 %v696, %v770
        %v772 = vpop.f32.mrf.mxu0
        %773 = vdwg.mxu0
        %v774 = vld [vmem:[%s275] sm:$0xff]
        %v775 = vld [vmem:[%s3] sm:$0x1]
        %777 = vset.pattern.permute.xlu0 0
        %778 = vperm.xlu0 %777, %v774
        %v779 = vpop.permute.xlu0 %778
        %v782 = vlaneseq
        %v783 = vshrl.u32 %v782, 7
        %v784 = vsub.s32 0, %v783
        %v785 = vrot.slane %v775, %v784
        %v787 = vadd.f32 %v779, %v785
        %v788 = vmul.f32 %v771, 2.0
        %v789 = vsub.f32 %v787, %v788
        %v790 = vld [vmem:[%s279] sm:$0xff]
        %v791 = vld [vmem:[%s5] sm:$0x1]
        %792 = vset.pattern.permute.xlu0 0
        %793 = vperm.xlu0 %792, %v790
        %v794 = vpop.permute.xlu0 %793
        %v795 = vlaneseq
        %v796 = vshrl.u32 %v795, 7
        %v797 = vsub.s32 0, %v796
        %v798 = vrot.slane %v791, %v797
        %vm799 = vcmp.eq.s32.totalorder %v794, %v798
        %v800 = vlaneseq
        %v801 = vshrl.u32 %v800, 7
        %s802 = smul.u32 %s20, 8
        %v803 = vstv %s802
        %v804 = vadd.s32 %v801, %v803
        %v805 = vlaneseq
        %v806 = vand.u32 %v805, 127
        %vm807 = vcmp.ne.s32.totalorder %v804, %v806
        %vm808 = vmand %vm799, %vm807
        %vm809 = vmxor %vm799, 1
        %v810 = vsel %vm808, %v789, 1e+30
        %vm811 = vcmask 130048
        %v812 = vsel %vm811, %v810, inf
        %813 = vmin.xlane.f32.xlu0 %v812
        %v814 = vpop.xlane.xlu0 %813
        %v815 = vsel %vm809, %v789, 1e+30
        %v816 = vsel %vm811, %v815, inf
        %817 = vmin.xlane.f32.xlu0 %v816
        %v818 = vpop.xlane.xlu0 %817
        %v819 = vmax.f32 %v814, 0.0
        %v820 = vrsqrt.pop %v819
        %v821 = vmul.f32 %v819, %v820
        %vm822 = vcmp.eq.f32.partialorder %v819, inf
        %v823 = vsel %vm822, %v819, %v821
        %vm824 = vcmp.eq.f32.partialorder %v819, 0.0
        %v825 = vand.u32 %v819, 2147483648
        %v826 = vsel %vm824, %v825, %v823
        %v827 = vmax.f32 %v818, 0.0
        %v828 = vrsqrt.pop %v827
        %v829 = vmul.f32 %v827, %v828
        %vm830 = vcmp.eq.f32.partialorder %v827, inf
        %v831 = vsel %vm830, %v827, %v829
        %vm832 = vcmp.eq.f32.partialorder %v827, 0.0
        %v833 = vand.u32 %v827, 2147483648
        %v834 = vsel %vm832, %v833, %v831
        %v835 = vsel %vm799, 1, 0
        %v836 = vsel %vm811, %v835, 0
        %v837 = vand.u32 %v836, 65535
        %v838 = vshrl.u32 %v836, 16
        %v839 = vcvt.s32.f32 %v837
        %v840 = vcvt.s32.f32 %v838
        %841 = vadd.xlane.f32.xlu0 %v839
        %v842 = vpop.xlane.xlu0 %841
        %843 = vadd.xlane.f32.xlu0 %v840
        %v844 = vpop.xlane.xlu0 %843
        %v845 = vcvt.f32.s32 %v842
        %v846 = vcvt.f32.s32 %v844
        %v847 = vshll.u32 %v846, 16
        %v848 = vadd.s32 %v847, %v845
        %v849 = vsub.s32 %v848, 1
        %v850 = vsub.s32 16, %v848
        %vm851 = vcmp.gt.s32.totalorder %v849, 1
        %vm852 = vcmp.gt.s32.totalorder %v850, 0
        %vm853 = vmand %vm851, %vm852
        %v854 = vsel %vm853, 1, 0
        %v855 = vcvt.s32.f32 %v854
        %v856 = vsub.f32 %v826, %v834
        %v857 = vmul.f32 %v856, 2.5
        %v858 = vmax.f32 %v857, 0.0
        %v859 = vand.u32 2147483647, %v857
        %v860 = vsub.f32 0.0, %v859
        %v861 = vmul.f32 %v860, 1.442695
        %v862 = vpow.pop %v861
        %v863 = vadd.f32 %v862, 1.0
        %v864 = vlog2.pop %v863
        %v865 = vmul.f32 %v864, 0.6931472
        %v866 = vadd.f32 %v858, %v865
        %v867 = vmul.f32 %v866, %v855
        %vm868 = vcmask 7168
        %v869 = vsel %vm868, %v867, 0.0
        %870 = vadd.xlane.f32.xlu0 %v869
        %v871 = vpop.xlane.xlu0 %870
        %v872 = vrot.slane %v871, 4
        %v873 = vadd.f32 %v871, %v872
        %v874 = vrot.slane %v873, 2
        %v875 = vadd.f32 %v873, %v874
        %v876 = vrot.slane %v875, 1
        %v877 = vadd.f32 %v875, %v876
        %s878 = vtos %v877
        %v879 = vsel %vm868, %v855, 0.0
        %880 = vadd.xlane.f32.xlu0 %v879
        %v881 = vpop.xlane.xlu0 %880
        %v882 = vrot.slane %v881, 4
        %v883 = vadd.f32 %v881, %v882
        %v884 = vrot.slane %v883, 2
        %v885 = vadd.f32 %v883, %v884
        %v886 = vrot.slane %v885, 1
        %v887 = vadd.f32 %v885, %v886
        %s888 = vtos %v887
        %vm889 = vcmp.eq.s32.totalorder %v806, 0
        %v890 = vstv %s878
        %v891 = vstv %s888
        %v892 = vsel %vm889, %v890, %v891
        %vm893 = vcmask 8192
        %894 = vst.msk [vmem:[%s267] sm:$0x1] %vm893, %v892
        %s895 = sand.u32 %s169, 1
        %s896 = scalar_lea.sflag [#allocation3], %s895
        %s897 = sand.u32 %s169, 1
        %s898 = scalar_lea.vmem [#allocation2], %s897
        // Predicated region
        $region45: #{tpu_custom_call.1} parent=43 // pred_check
          %p899 = pneg %p179
        $region46: #{tpu_custom_call.1} parent=43 // pred_check_branch
          %901 = sbr.rel (%p899) target = $region48
        $region47: #{tpu_custom_call.1} parent=43 // pred_region
          %s903 = ssub.s32 16, 16
          %904 = vsyncadd %s896, %s903
          %s905 = smul.addr %s20, 16
          %s906 = scalar_lea.hbm %s6, %s905
          %s908 = sshll.u32 %s898, 4
          %s909 = int_to_ptr.vmem [resolvable:$true] %s908
          %911 = dma.vmem_to_hbm [thread:$0]  %s909, 16, %s906, %s896
        $region48: #{tpu_custom_call.1} parent=43 // pred_fallthru
          _
      $region44: #{tpu_custom_call.1} parent=5 // pred_fallthru
        _
      %p912 = scmp.le.s32.totalorder 2, %s15
      // Predicated region
      $region49: #{tpu_custom_call.1} parent=5 // pred_check
        %p913 = pneg %p912
      $region50: #{tpu_custom_call.1} parent=5 // pred_check_branch
        %915 = sbr.rel (%p913) target = $region52
      $region51: #{tpu_custom_call.1} parent=5 // pred_region
        %s916 = ssub.s32 %s15, 2
        // Predicated region
        $region53: #{tpu_custom_call.1} parent=51 // pred_check
          %p917 = pneg %p185
        $region54: #{tpu_custom_call.1} parent=51 // pred_check_branch
          %919 = sbr.rel (%p917) target = $region56
        $region55: #{tpu_custom_call.1} parent=51 // pred_region
          %s920 = sand.u32 %s170, 1
          %s921 = scalar_lea.sflag [#allocation3], %s920
          %s922 = sand.u32 %s170, 1
          %s923 = scalar_lea.vmem [#allocation2], %s922
          %924 = dma.done %s921, 16
        $region56: #{tpu_custom_call.1} parent=51 // pred_fallthru
          _
      $region52: #{tpu_custom_call.1} parent=5 // pred_fallthru
        _
    $region6: #{tpu_custom_call.1} parent=1 // loop_footer
      %s19 = sadd.s32 1, %s15
    $region7: #{tpu_custom_call.1} parent=1 // loop_footer_branch
      %14 = sbr.rel target = $region3
    $region8: #{tpu_custom_call.1} parent=1 // loop_exit
      _
    %925 = vsyncpa [#allocation3], 1
    %s926 = scalar_lea.sflag [#allocation3], 1
    %927 = vsyncpa %s926, 1

</llo_original>
